<compile_context>
chip_gen: v7x
topology: tpu7x:2x2x1
jax: 0.10.0
libtpu: 0.0.40
codegen_flags: <defaults>
</compile_context>

<pallas_src>
import functools
import math

import jax
import jax.numpy as jnp
from jax.experimental import pallas as pl
from jax.experimental.pallas import tpu as pltpu

LEAKY_SLOPE = 0.2
BN_EPS = 1e-5


def roi_block_kernel(x_ref, w1_ref, pc_ref, fc1_ref, fc2_ref, mask_ref,
                     pool_ref, exp_ref, out_ref, *, inv_l):
    f32 = jnp.float32
    x = x_ref[0]                          # (C, BL) bf16, BL = bt * l
    BL = x.shape[1]

    nf = mask_ref[0:1, :]                 # (1, BL) f32: 1.0 where t != 0 in segment
    nl = mask_ref[1:2, :]                 # (1, BL) f32: 1.0 where t != l-1 in segment

    def at_prev(a):                       # a[:, t-1], zero at each segment start
        return pltpu.roll(a, shift=1, axis=1) * nf

    def at_next(a):                       # a[:, t+1], zero at each segment end
        # non-negative shift BL-1 == rotate by -1 (negative shifts avoided).
        return pltpu.roll(a, shift=BL - 1, axis=1) * nl

    # ---- conv1: Conv1d(C, C, k=3, pad=1, bias=False).
    # Per-tap matmuls on the unshifted input; shift the f32 results instead of
    # building a (3C, BL) stacked operand.
    ym = jnp.dot(w1_ref[0], x, preferred_element_type=f32)      # tap t-1
    yc = jnp.dot(w1_ref[1], x, preferred_element_type=f32)      # tap t
    yp = jnp.dot(w1_ref[2], x, preferred_element_type=f32)      # tap t+1
    h = at_prev(ym) + yc + at_next(yp)

    # ---- BatchNorm1d #1 (inference, folded) + LeakyReLU(0.2)   [VPU]
    h = h * pc_ref[:, 0:1] + pc_ref[:, 1:2]
    h = jnp.maximum(h, LEAKY_SLOPE * h)

    # ---- conv2: depthwise Conv1d(C, C, k=3, pad=1, groups=C)   [VPU + XLU]
    h = (pc_ref[:, 2:3] * at_prev(h)
         + pc_ref[:, 3:4] * h
         + pc_ref[:, 4:5] * at_next(h))

    # ---- BatchNorm1d #2 (inference, folded)
    h = h * pc_ref[:, 5:6] + pc_ref[:, 6:7]

    # ---- SE gate: per-segment mean pool -> FC -> ReLU -> FC -> sigmoid ->
    # broadcast back over the segment.  All done as small MXU matmuls against
    # a precomputed per-segment one-hot indicator (MXU has large slack here).
    pooled = jnp.dot(h, pool_ref[...], preferred_element_type=f32) * inv_l   # (C, bt)
    y = jnp.maximum(jnp.dot(fc1_ref[...], pooled,
                            preferred_element_type=f32), 0.0)                # (red, bt)
    gate = jax.nn.sigmoid(jnp.dot(fc2_ref[...], y,
                                  preferred_element_type=f32))               # (C, bt)
    scale = jnp.dot(gate, exp_ref[...], preferred_element_type=f32)          # (C, BL)

    out_ref[0] = (h * scale).astype(out_ref.dtype)


def _plan_tiles(b, l, C):
    """Pick bt (batch elems per grid step) and the padded batch size."""
    target_bl = 4096                       # lane-dense regime (1024-8192)
    slab_budget = 20 * 1024 * 1024         # bytes for the (C, BL)-sized slabs
    bl_cap = max(l, slab_budget // (40 * C))
    bl_cap = min(bl_cap, max(l, target_bl))
    bt = max(1, min(b, bl_cap // l))
    # Keep each (bt, BL) f32 SE indicator operand <= ~2 MiB.
    max_bt_ind = max(1, math.isqrt((2 * 1024 * 1024) // (4 * l)) if l > 0 else 1)
    bt = max(1, min(bt, max_bt_ind))
    # v7x has 2 TensorCores: prefer >= 2 grid steps if tiles stay lane-dense.
    half = (b + 1) // 2
    if b >= 2 and half * l >= 1024:
        bt = min(bt, half)
    b_pad = ((b + bt - 1) // bt) * bt
    return bt, b_pad


def pack_params(params):
    """Pack module parameters into the kernel's fused operands (done once)."""
    (w1m, w1c, w1p, bn1s, bn1b, w2m, w2c, w2p, bn2s, bn2b, fc1, fc2) = params
    C = w1c.shape[0]
    w1 = jnp.stack([w1m, w1c, w1p], axis=0).astype(jnp.bfloat16)        # (3,C,C)
    pc = jnp.concatenate([bn1s, bn1b, w2m, w2c, w2p, bn2s, bn2b,
                          jnp.zeros((C, 1), jnp.float32)], axis=1)       # (C, 8)
    return w1, pc, fc1.astype(jnp.float32), fc2.astype(jnp.float32)


@jax.jit
def roi_block_forward(x4d, w1, pc, fc1, fc2):
    b, c, r, l = x4d.shape
    C = c * r
    red = fc1.shape[0]
    bt, b_pad = _plan_tiles(b, l, C)
    nsteps = b_pad // bt
    BL = bt * l

    # Pack bt batch elements along the lane axis; cast to bf16 first so the
    # layout plumbing moves half the bytes.
    x = x4d.reshape(b, C, l)
    if b_pad != b:
        x = jnp.concatenate([x, jnp.zeros((b_pad - b, C, l), x.dtype)], axis=0)
    xg = (x.astype(jnp.bfloat16)
           .reshape(nsteps, bt, C, l)
           .transpose(0, 2, 1, 3)
           .reshape(nsteps, C, BL))

    # Precomputed boundary masks and per-segment one-hot indicators.
    pos = jnp.arange(BL, dtype=jnp.int32)
    t_in_seg = pos % l
    masks = jnp.stack([(t_in_seg != 0), (t_in_seg != l - 1)],
                      axis=0).astype(jnp.float32)                        # (2, BL)
    seg = pos // l
    exp_ind = (seg[None, :] == jnp.arange(bt, dtype=jnp.int32)[:, None]
               ).astype(jnp.float32)                                     # (bt, BL)
    pool_ind = exp_ind.T                                                 # (BL, bt)

    kernel = functools.partial(roi_block_kernel, inv_l=1.0 / l)

    out = pl.pallas_call(
        kernel,
        out_shape=jax.ShapeDtypeStruct((nsteps, C, BL), jnp.float32),
        grid_spec=pltpu.PrefetchScalarGridSpec(
            num_scalar_prefetch=0,
            grid=(nsteps,),
            in_specs=[
                pl.BlockSpec((1, C, BL), lambda i: (i, 0, 0)),   # activations
                pl.BlockSpec((3, C, C), lambda i: (0, 0, 0)),    # conv1 taps
                pl.BlockSpec((C, 8), lambda i: (0, 0)),          # per-chan vecs
                pl.BlockSpec((red, C), lambda i: (0, 0)),        # SE fc1
                pl.BlockSpec((C, red), lambda i: (0, 0)),        # SE fc2
                pl.BlockSpec((2, BL), lambda i: (0, 0)),         # boundary masks
                pl.BlockSpec((BL, bt), lambda i: (0, 0)),        # pool indicator
                pl.BlockSpec((bt, BL), lambda i: (0, 0)),        # expand indicator
            ],
            out_specs=pl.BlockSpec((1, C, BL), lambda i: (i, 0, 0)),
        ),
        compiler_params=pltpu.CompilerParams(
            dimension_semantics=("parallel",),
            vmem_limit_bytes=32 * 1024 * 1024),
    )(xg, w1, pc, fc1, fc2, masks, pool_ind, exp_ind)

    out = (out.reshape(nsteps, C, bt, l)
              .transpose(0, 2, 1, 3)
              .reshape(b_pad, C, l))[:b]
    return out.reshape(b, c, r, l)


def init_params(key, C, red):
    ks = jax.random.split(key, 12)
    # conv1 weight (C, C, 3), bias=False
    w1 = jax.random.normal(ks[0], (C, C, 3), jnp.float32) * 0.05
    w1m, w1c, w1p = w1[:, :, 0], w1[:, :, 1], w1[:, :, 2]
    # BatchNorm1d #1 (inference: gamma, beta, running mean/var) -> fold
    g1 = 1.0 + 0.1 * jax.random.normal(ks[1], (C,), jnp.float32)
    b1 = 0.1 * jax.random.normal(ks[2], (C,), jnp.float32)
    m1 = 0.1 * jax.random.normal(ks[3], (C,), jnp.float32)
    v1 = 1.0 + 0.5 * jax.random.uniform(ks[4], (C,), jnp.float32)
    s1 = g1 / jnp.sqrt(v1 + BN_EPS)
    bn1s, bn1b = s1.reshape(C, 1), (b1 - m1 * s1).reshape(C, 1)
    # conv2 depthwise weight (C, 1, 3), bias=False
    w2 = jax.random.normal(ks[5], (C, 3), jnp.float32) * 0.3
    w2m, w2c, w2p = w2[:, 0:1], w2[:, 1:2], w2[:, 2:3]
    # BatchNorm1d #2
    g2 = 1.0 + 0.1 * jax.random.normal(ks[6], (C,), jnp.float32)
    b2 = 0.1 * jax.random.normal(ks[7], (C,), jnp.float32)
    m2 = 0.1 * jax.random.normal(ks[8], (C,), jnp.float32)
    v2 = 1.0 + 0.5 * jax.random.uniform(ks[9], (C,), jnp.float32)
    s2 = g2 / jnp.sqrt(v2 + BN_EPS)
    bn2s, bn2b = s2.reshape(C, 1), (b2 - m2 * s2).reshape(C, 1)
    # SE layer: Linear(C, C//16, bias=False), Linear(C//16, C, bias=False)
    fc1 = jax.random.normal(ks[10], (red, C), jnp.float32) * 0.2
    fc2 = jax.random.normal(ks[11], (C, red), jnp.float32) * 0.2
    return (w1m, w1c, w1p, bn1s, bn1b, w2m, w2c, w2p, bn2s, bn2b, fc1, fc2)


def roi_block_ref(x4d, params):
    """Pure-JAX reference (conv1 in bf16 / f32 accumulation, like the kernel)."""
    b, c, r, l = x4d.shape
    C = c * r
    (w1m, w1c, w1p, bn1s, bn1b, w2m, w2c, w2p, bn2s, bn2b, fc1, fc2) = params
    x = x4d.reshape(b, C, l).astype(jnp.float32)
    xb = x.astype(jnp.bfloat16)
    xp = jnp.pad(xb, ((0, 0), (0, 0), (1, 1)))
    xs = jnp.concatenate([xp[:, :, :l], xp[:, :, 1:l + 1], xp[:, :, 2:l + 2]],
                         axis=1)                                   # (b, 3C, l)
    w1 = jnp.concatenate([w1m, w1c, w1p], axis=1).astype(jnp.bfloat16)
    h = jnp.einsum('ok,bkl->bol', w1, xs, preferred_element_type=jnp.float32)
    h = h * bn1s[None] + bn1b[None]
    h = jnp.where(h >= 0, h, LEAKY_SLOPE * h)
    hp = jnp.pad(h, ((0, 0), (0, 0), (1, 1)))
    h = (w2m[None] * hp[:, :, :l] + w2c[None] * hp[:, :, 1:l + 1]
         + w2p[None] * hp[:, :, 2:l + 2])
    h = h * bn2s[None] + bn2b[None]
    hi = jax.lax.Precision.HIGHEST
    y = h.mean(axis=-1)                                            # (b, C)
    y = jnp.maximum(jnp.einsum('bc,rc->br', y, fc1, precision=hi), 0.0)
    y = jax.nn.sigmoid(jnp.einsum('br,cr->bc', y, fc2, precision=hi))
    h = h * y[:, :, None]
    return h.reshape(b, c, r, l)


if __name__ == "__main__":
    key = jax.random.PRNGKey(0)
    b, c, r, l = 2, 4, 16, 16
    C = c * r              # inplanes = 64
    red = max(1, C // 16)  # SE hidden = 4
    kx, kp = jax.random.split(key)
    x = jax.random.normal(kx, (b, c, r, l), jnp.float32)
    params = init_params(kp, C, red)
    w1, pc, fc1, fc2 = pack_params(params)

    out = jax.block_until_ready(roi_block_forward(x, w1, pc, fc1, fc2))

    ref = roi_block_ref(x, params)
    assert out.shape == (b, c, r, l), out.shape
    err = float(jnp.max(jnp.abs(out - ref)))
    # Tolerance covers bf16 MXU operands and platform matmul-precision policy.
    assert bool(jnp.allclose(out, ref, atol=5e-3, rtol=5e-3)), err
    print("KERNEL_OK")
</pallas_src>

<mosaic_0001>
module attributes {stable_mosaic.version = 11 : i64} {
  func.func @roi_block_kernel(%arg0: i32, %arg1: memref<1x64x32xbf16, #tpu.memory_space<vmem>>, %arg2: memref<3x64x64xbf16, #tpu.memory_space<vmem>>, %arg3: memref<64x8xf32, #tpu.memory_space<vmem>>, %arg4: memref<4x64xf32, #tpu.memory_space<vmem>>, %arg5: memref<64x4xf32, #tpu.memory_space<vmem>>, %arg6: memref<2x32xf32, #tpu.memory_space<vmem>>, %arg7: memref<32x2xf32, #tpu.memory_space<vmem>>, %arg8: memref<2x32xf32, #tpu.memory_space<vmem>>, %arg9: memref<1x64x32xf32, #tpu.memory_space<vmem>>) attributes {dimension_semantics = [#tpu.dimension_semantics<parallel>], iteration_bounds = array<i64: 1>, scalar_prefetch = 0 : i64, scratch_operands = 0 : i64, tpu.core_type = #tpu.core_type<tc>, window_params = [{transform_indices = @transform_0, window_bounds = array<i64: 1, 64, 32>}, {pipeline_mode = #tpu.pipeline_mode<synchronous>, transform_indices = @transform_1, window_bounds = array<i64: 3, 64, 64>}, {pipeline_mode = #tpu.pipeline_mode<synchronous>, transform_indices = @transform_2, window_bounds = array<i64: 64, 8>}, {pipeline_mode = #tpu.pipeline_mode<synchronous>, transform_indices = @transform_3, window_bounds = array<i64: 4, 64>}, {pipeline_mode = #tpu.pipeline_mode<synchronous>, transform_indices = @transform_4, window_bounds = array<i64: 64, 4>}, {pipeline_mode = #tpu.pipeline_mode<synchronous>, transform_indices = @transform_5, window_bounds = array<i64: 2, 32>}, {pipeline_mode = #tpu.pipeline_mode<synchronous>, transform_indices = @transform_6, window_bounds = array<i64: 32, 2>}, {pipeline_mode = #tpu.pipeline_mode<synchronous>, transform_indices = @transform_7, window_bounds = array<i64: 2, 32>}, {transform_indices = @transform_8, window_bounds = array<i64: 1, 64, 32>}]} {
    %c0 = arith.constant 0 : index
    %c0_0 = arith.constant 0 : index
    %c0_1 = arith.constant 0 : index
    %0 = vector.load %arg1[%c0, %c0_0, %c0_1] : memref<1x64x32xbf16, #tpu.memory_space<vmem>>, vector<1x64x32xbf16>
    %1 = vector.shape_cast %0 : vector<1x64x32xbf16> to vector<64x32xbf16>
    %c0_2 = arith.constant 0 : index
    %c0_3 = arith.constant 0 : index
    %2 = vector.load %arg6[%c0_2, %c0_3] : memref<2x32xf32, #tpu.memory_space<vmem>>, vector<1x32xf32>
    %c1 = arith.constant 1 : index
    %c0_4 = arith.constant 0 : index
    %3 = vector.load %arg6[%c1, %c0_4] : memref<2x32xf32, #tpu.memory_space<vmem>>, vector<1x32xf32>
    %c0_5 = arith.constant 0 : index
    %c0_6 = arith.constant 0 : index
    %c0_7 = arith.constant 0 : index
    %4 = vector.load %arg2[%c0_5, %c0_6, %c0_7] : memref<3x64x64xbf16, #tpu.memory_space<vmem>>, vector<1x64x64xbf16>
    %5 = vector.shape_cast %4 : vector<1x64x64xbf16> to vector<64x64xbf16>
    %cst = arith.constant dense<0.000000e+00> : vector<64x32xf32>
    %6 = tpu.matmul %5, %1, %cst {dimension_numbers = #tpu.dot_dimension_numbers<[1], [0], [0], [1], [0, 0, 1, 1], [], []>} : vector<64x64xbf16>, vector<64x32xbf16>, vector<64x32xf32> -> vector<64x32xf32>
    %c1_8 = arith.constant 1 : index
    %c0_9 = arith.constant 0 : index
    %c0_10 = arith.constant 0 : index
    %7 = vector.load %arg2[%c1_8, %c0_9, %c0_10] : memref<3x64x64xbf16, #tpu.memory_space<vmem>>, vector<1x64x64xbf16>
    %8 = vector.shape_cast %7 : vector<1x64x64xbf16> to vector<64x64xbf16>
    %cst_11 = arith.constant dense<0.000000e+00> : vector<64x32xf32>
    %9 = tpu.matmul %8, %1, %cst_11 {dimension_numbers = #tpu.dot_dimension_numbers<[1], [0], [0], [1], [0, 0, 1, 1], [], []>} : vector<64x64xbf16>, vector<64x32xbf16>, vector<64x32xf32> -> vector<64x32xf32>
    %c2 = arith.constant 2 : index
    %c0_12 = arith.constant 0 : index
    %c0_13 = arith.constant 0 : index
    %10 = vector.load %arg2[%c2, %c0_12, %c0_13] : memref<3x64x64xbf16, #tpu.memory_space<vmem>>, vector<1x64x64xbf16>
    %11 = vector.shape_cast %10 : vector<1x64x64xbf16> to vector<64x64xbf16>
    %cst_14 = arith.constant dense<0.000000e+00> : vector<64x32xf32>
    %12 = tpu.matmul %11, %1, %cst_14 {dimension_numbers = #tpu.dot_dimension_numbers<[1], [0], [0], [1], [0, 0, 1, 1], [], []>} : vector<64x64xbf16>, vector<64x32xbf16>, vector<64x32xf32> -> vector<64x32xf32>
    %c1_i32 = arith.constant 1 : i32
    %13 = tpu.dynamic_rotate %6 by %c1_i32 dim 1 : vector<64x32xf32>, i32 -> vector<64x32xf32>
    %14 = vector.broadcast %2 : vector<1x32xf32> to vector<64x32xf32>
    %15 = arith.mulf %13, %14 : vector<64x32xf32>
    %16 = arith.addf %15, %9 : vector<64x32xf32>
    %c31_i32 = arith.constant 31 : i32
    %17 = tpu.dynamic_rotate %12 by %c31_i32 dim 1 : vector<64x32xf32>, i32 -> vector<64x32xf32>
    %18 = vector.broadcast %3 : vector<1x32xf32> to vector<64x32xf32>
    %19 = arith.mulf %17, %18 : vector<64x32xf32>
    %20 = arith.addf %16, %19 : vector<64x32xf32>
    %c0_15 = arith.constant 0 : index
    %c0_16 = arith.constant 0 : index
    %21 = vector.load %arg3[%c0_15, %c0_16] : memref<64x8xf32, #tpu.memory_space<vmem>>, vector<64x1xf32>
    %22 = vector.broadcast %21 : vector<64x1xf32> to vector<64x32xf32>
    %23 = arith.mulf %20, %22 : vector<64x32xf32>
    %c0_17 = arith.constant 0 : index
    %c1_18 = arith.constant 1 : index
    %24 = vector.load %arg3[%c0_17, %c1_18] : memref<64x8xf32, #tpu.memory_space<vmem>>, vector<64x1xf32>
    %25 = vector.broadcast %24 : vector<64x1xf32> to vector<64x32xf32>
    %26 = arith.addf %23, %25 : vector<64x32xf32>
    %cst_19 = arith.constant 2.000000e-01 : f32
    %27 = vector.broadcast %cst_19 : f32 to vector<64x32xf32>
    %28 = arith.mulf %27, %26 : vector<64x32xf32>
    %29 = arith.maximumf %26, %28 : vector<64x32xf32>
    %c0_20 = arith.constant 0 : index
    %c2_21 = arith.constant 2 : index
    %30 = vector.load %arg3[%c0_20, %c2_21] : memref<64x8xf32, #tpu.memory_space<vmem>>, vector<64x1xf32>
    %c1_i32_22 = arith.constant 1 : i32
    %31 = tpu.dynamic_rotate %29 by %c1_i32_22 dim 1 : vector<64x32xf32>, i32 -> vector<64x32xf32>
    %32 = vector.broadcast %2 : vector<1x32xf32> to vector<64x32xf32>
    %33 = arith.mulf %31, %32 : vector<64x32xf32>
    %34 = vector.broadcast %30 : vector<64x1xf32> to vector<64x32xf32>
    %35 = arith.mulf %34, %33 : vector<64x32xf32>
    %c0_23 = arith.constant 0 : index
    %c3 = arith.constant 3 : index
    %36 = vector.load %arg3[%c0_23, %c3] : memref<64x8xf32, #tpu.memory_space<vmem>>, vector<64x1xf32>
    %37 = vector.broadcast %36 : vector<64x1xf32> to vector<64x32xf32>
    %38 = arith.mulf %37, %29 : vector<64x32xf32>
    %39 = arith.addf %35, %38 : vector<64x32xf32>
    %c0_24 = arith.constant 0 : index
    %c4 = arith.constant 4 : index
    %40 = vector.load %arg3[%c0_24, %c4] : memref<64x8xf32, #tpu.memory_space<vmem>>, vector<64x1xf32>
    %c31_i32_25 = arith.constant 31 : i32
    %41 = tpu.dynamic_rotate %29 by %c31_i32_25 dim 1 : vector<64x32xf32>, i32 -> vector<64x32xf32>
    %42 = vector.broadcast %3 : vector<1x32xf32> to vector<64x32xf32>
    %43 = arith.mulf %41, %42 : vector<64x32xf32>
    %44 = vector.broadcast %40 : vector<64x1xf32> to vector<64x32xf32>
    %45 = arith.mulf %44, %43 : vector<64x32xf32>
    %46 = arith.addf %39, %45 : vector<64x32xf32>
    %c0_26 = arith.constant 0 : index
    %c5 = arith.constant 5 : index
    %47 = vector.load %arg3[%c0_26, %c5] : memref<64x8xf32, #tpu.memory_space<vmem>>, vector<64x1xf32>
    %48 = vector.broadcast %47 : vector<64x1xf32> to vector<64x32xf32>
    %49 = arith.mulf %46, %48 : vector<64x32xf32>
    %c0_27 = arith.constant 0 : index
    %c6 = arith.constant 6 : index
    %50 = vector.load %arg3[%c0_27, %c6] : memref<64x8xf32, #tpu.memory_space<vmem>>, vector<64x1xf32>
    %51 = vector.broadcast %50 : vector<64x1xf32> to vector<64x32xf32>
    %52 = arith.addf %49, %51 : vector<64x32xf32>
    %c0_28 = arith.constant 0 : index
    %c0_29 = arith.constant 0 : index
    %53 = vector.load %arg7[%c0_28, %c0_29] : memref<32x2xf32, #tpu.memory_space<vmem>>, vector<32x2xf32>
    %cst_30 = arith.constant dense<0.000000e+00> : vector<64x2xf32>
    %54 = tpu.matmul %52, %53, %cst_30 {dimension_numbers = #tpu.dot_dimension_numbers<[1], [0], [0], [1], [0, 0, 1, 1], [], []>} : vector<64x32xf32>, vector<32x2xf32>, vector<64x2xf32> -> vector<64x2xf32>
    %cst_31 = arith.constant 6.250000e-02 : f32
    %55 = vector.broadcast %cst_31 : f32 to vector<64x2xf32>
    %56 = arith.mulf %54, %55 : vector<64x2xf32>
    %c0_32 = arith.constant 0 : index
    %c0_33 = arith.constant 0 : index
    %57 = vector.load %arg4[%c0_32, %c0_33] : memref<4x64xf32, #tpu.memory_space<vmem>>, vector<4x64xf32>
    %cst_34 = arith.constant dense<0.000000e+00> : vector<4x2xf32>
    %58 = tpu.matmul %57, %56, %cst_34 {dimension_numbers = #tpu.dot_dimension_numbers<[1], [0], [0], [1], [0, 0, 1, 1], [], []>} : vector<4x64xf32>, vector<64x2xf32>, vector<4x2xf32> -> vector<4x2xf32>
    %cst_35 = arith.constant 0.000000e+00 : f32
    %59 = vector.broadcast %cst_35 : f32 to vector<4x2xf32>
    %60 = arith.maximumf %58, %59 : vector<4x2xf32>
    %c0_36 = arith.constant 0 : index
    %c0_37 = arith.constant 0 : index
    %61 = vector.load %arg5[%c0_36, %c0_37] : memref<64x4xf32, #tpu.memory_space<vmem>>, vector<64x4xf32>
    %cst_38 = arith.constant dense<0.000000e+00> : vector<64x2xf32>
    %62 = tpu.matmul %61, %60, %cst_38 {dimension_numbers = #tpu.dot_dimension_numbers<[1], [0], [0], [1], [0, 0, 1, 1], [], []>} : vector<64x4xf32>, vector<4x2xf32>, vector<64x2xf32> -> vector<64x2xf32>
    %63 = arith.negf %62 : vector<64x2xf32>
    %64 = math.exp %63 : vector<64x2xf32>
    %cst_39 = arith.constant 1.000000e+00 : f32
    %65 = vector.broadcast %cst_39 : f32 to vector<64x2xf32>
    %66 = arith.addf %65, %64 : vector<64x2xf32>
    %67 = arith.divf %65, %66 : vector<64x2xf32>
    %c0_40 = arith.constant 0 : index
    %c0_41 = arith.constant 0 : index
    %68 = vector.load %arg8[%c0_40, %c0_41] : memref<2x32xf32, #tpu.memory_space<vmem>>, vector<2x32xf32>
    %cst_42 = arith.constant dense<0.000000e+00> : vector<64x32xf32>
    %69 = tpu.matmul %67, %68, %cst_42 {dimension_numbers = #tpu.dot_dimension_numbers<[1], [0], [0], [1], [0, 0, 1, 1], [], []>} : vector<64x2xf32>, vector<2x32xf32>, vector<64x32xf32> -> vector<64x32xf32>
    %70 = arith.mulf %52, %69 : vector<64x32xf32>
    %c0_43 = arith.constant 0 : index
    %c0_44 = arith.constant 0 : index
    %c0_45 = arith.constant 0 : index
    %71 = vector.load %arg9[%c0_43, %c0_44, %c0_45] : memref<1x64x32xf32, #tpu.memory_space<vmem>>, vector<1x64x32xf32>
    %72 = vector.shape_cast %71 : vector<1x64x32xf32> to vector<64x32xf32>
    %73 = vector.shape_cast %70 : vector<64x32xf32> to vector<1x64x32xf32>
    tpu.vector_store %arg9[%c0_43, %c0_44, %c0_45], %73 {strides = array<i32>} : memref<1x64x32xf32, #tpu.memory_space<vmem>>, vector<1x64x32xf32>,
    return
  }
  func.func @transform_0(%arg0: i32) -> (i32, i32, i32) {
    %c0_i32 = arith.constant 0 : i32
    %c0_i32_0 = arith.constant 0 : i32
    %c0_i32_1 = arith.constant 0 : i32
    return %arg0, %c0_i32, %c0_i32_0 : i32, i32, i32
  }
  func.func @transform_1(%arg0: i32) -> (i32, i32, i32) {
    %c0_i32 = arith.constant 0 : i32
    %c0_i32_0 = arith.constant 0 : i32
    %c0_i32_1 = arith.constant 0 : i32
    %c0_i32_2 = arith.constant 0 : i32
    return %c0_i32, %c0_i32_0, %c0_i32_1 : i32, i32, i32
  }
  func.func @transform_2(%arg0: i32) -> (i32, i32) {
    %c0_i32 = arith.constant 0 : i32
    %c0_i32_0 = arith.constant 0 : i32
    %c0_i32_1 = arith.constant 0 : i32
    return %c0_i32, %c0_i32_0 : i32, i32
  }
  func.func @transform_3(%arg0: i32) -> (i32, i32) {
    %c0_i32 = arith.constant 0 : i32
    %c0_i32_0 = arith.constant 0 : i32
    %c0_i32_1 = arith.constant 0 : i32
    return %c0_i32, %c0_i32_0 : i32, i32
  }
  func.func @transform_4(%arg0: i32) -> (i32, i32) {
    %c0_i32 = arith.constant 0 : i32
    %c0_i32_0 = arith.constant 0 : i32
    %c0_i32_1 = arith.constant 0 : i32
    return %c0_i32, %c0_i32_0 : i32, i32
  }
  func.func @transform_5(%arg0: i32) -> (i32, i32) {
    %c0_i32 = arith.constant 0 : i32
    %c0_i32_0 = arith.constant 0 : i32
    %c0_i32_1 = arith.constant 0 : i32
    return %c0_i32, %c0_i32_0 : i32, i32
  }
  func.func @transform_6(%arg0: i32) -> (i32, i32) {
    %c0_i32 = arith.constant 0 : i32
    %c0_i32_0 = arith.constant 0 : i32
    %c0_i32_1 = arith.constant 0 : i32
    return %c0_i32, %c0_i32_0 : i32, i32
  }
  func.func @transform_7(%arg0: i32) -> (i32, i32) {
    %c0_i32 = arith.constant 0 : i32
    %c0_i32_0 = arith.constant 0 : i32
    %c0_i32_1 = arith.constant 0 : i32
    return %c0_i32, %c0_i32_0 : i32, i32
  }
  func.func @transform_8(%arg0: i32) -> (i32, i32, i32) {
    %c0_i32 = arith.constant 0 : i32
    %c0_i32_0 = arith.constant 0 : i32
    %c0_i32_1 = arith.constant 0 : i32
    return %arg0, %c0_i32, %c0_i32_0 : i32, i32, i32
  }
}

</mosaic_0001>

<llo_original>
// kernel: roi_block_forward.1
$region0: #{roi_block_forward.1}
  #allocation0 [shape = 'u32[]', space=smem, size = 0x4, offset = 0x4, fixed_abs, tag = 'smem constant byte address 0x4 - core index']
  #allocation1 [shape = 'u32[144,128]{1,0:T(1,128)}', space=vmem, size = 0x12000, scoped, tag = 'internal scratch']
  %s0 = inlined_call_operand.vmem [shape: bf16[1,64,32], index: 0, kind: input, shape index: {}]
  %s1 = inlined_call_operand.vmem [shape: bf16[3,64,64], index: 1, kind: input, shape index: {}]
  %s2 = inlined_call_operand.vmem [shape: f32[64,8], index: 2, kind: input, shape index: {}]
  %s3 = inlined_call_operand.vmem [shape: f32[4,64], index: 3, kind: input, shape index: {}]
  %s4 = inlined_call_operand.vmem [shape: f32[64,4], index: 4, kind: input, shape index: {}]
  %s5 = inlined_call_operand.vmem [shape: f32[2,32], index: 5, kind: input, shape index: {}]
  %s6 = inlined_call_operand.vmem [shape: f32[32,2], index: 6, kind: input, shape index: {}]
  %s7 = inlined_call_operand.vmem [shape: f32[2,32], index: 7, kind: input, shape index: {}]
  %s8 = inlined_call_operand.vmem [shape: f32[1,64,32], index: 8, kind: output, shape index: {}]
  %s9 = sld [smem:[#allocation0]]
  $region42: #{roi_block_forward.1} parent=0
    _
  %s11 = ssub.s32 1, %s9
  %s12 = scalar_select 0, %s11, %s9
  // Predicated region
  $region2: #{roi_block_forward.1} parent=0 // pred_check
    _
  $region3: #{roi_block_forward.1} parent=0 // pred_check_branch
    %14 = sbr.rel (0) target = $region5
  $region4: #{roi_block_forward.1} parent=0 // pred_region
    _
  $region5: #{roi_block_forward.1} parent=0 // pred_fallthru
    _
  // Predicated region
  $region6: #{roi_block_forward.1} parent=0 // pred_check
    _
  $region7: #{roi_block_forward.1} parent=0 // pred_check_branch
    %16 = sbr.rel (0) target = $region9
  $region8: #{roi_block_forward.1} parent=0 // pred_region
    _
  $region9: #{roi_block_forward.1} parent=0 // pred_fallthru
    _
  // Predicated region
  $region10: #{roi_block_forward.1} parent=0 // pred_check
    _
  $region11: #{roi_block_forward.1} parent=0 // pred_check_branch
    %18 = sbr.rel (0) target = $region13
  $region12: #{roi_block_forward.1} parent=0 // pred_region
    _
  $region13: #{roi_block_forward.1} parent=0 // pred_fallthru
    _
  // Predicated region
  $region14: #{roi_block_forward.1} parent=0 // pred_check
    _
  $region15: #{roi_block_forward.1} parent=0 // pred_check_branch
    %20 = sbr.rel (0) target = $region17
  $region16: #{roi_block_forward.1} parent=0 // pred_region
    _
  $region17: #{roi_block_forward.1} parent=0 // pred_fallthru
    _
  // Predicated region
  $region18: #{roi_block_forward.1} parent=0 // pred_check
    _
  $region19: #{roi_block_forward.1} parent=0 // pred_check_branch
    %22 = sbr.rel (0) target = $region21
  $region20: #{roi_block_forward.1} parent=0 // pred_region
    _
  $region21: #{roi_block_forward.1} parent=0 // pred_fallthru
    _
  // Predicated region
  $region22: #{roi_block_forward.1} parent=0 // pred_check
    _
  $region23: #{roi_block_forward.1} parent=0 // pred_check_branch
    %24 = sbr.rel (0) target = $region25
  $region24: #{roi_block_forward.1} parent=0 // pred_region
    _
  $region25: #{roi_block_forward.1} parent=0 // pred_fallthru
    _
  // Predicated region
  $region26: #{roi_block_forward.1} parent=0 // pred_check
    _
  $region27: #{roi_block_forward.1} parent=0 // pred_check_branch
    %26 = sbr.rel (0) target = $region29
  $region28: #{roi_block_forward.1} parent=0 // pred_region
    _
  $region29: #{roi_block_forward.1} parent=0 // pred_fallthru
    _
  // Predicated region
  $region30: #{roi_block_forward.1} parent=0 // pred_check
    _
  $region31: #{roi_block_forward.1} parent=0 // pred_check_branch
    %28 = sbr.rel (0) target = $region33
  $region32: #{roi_block_forward.1} parent=0 // pred_region
    _
  $region33: #{roi_block_forward.1} parent=0 // pred_fallthru
    _
  %v30 = vld [vmem:[%s0] sm:$0xf]
  %v31 = vld [vmem:[%s0 + $0x4] sm:$0xf]
  %v32 = vld [vmem:[%s0 + $0x8] sm:$0xf]
  %v33 = vld [vmem:[%s0 + $0xc] sm:$0xf]
  %v34 = vld [vmem:[%s0 + $0x10] sm:$0xf]
  %v35 = vld [vmem:[%s0 + $0x14] sm:$0xf]
  %v36 = vld [vmem:[%s0 + $0x18] sm:$0xf]
  %v37 = vld [vmem:[%s0 + $0x1c] sm:$0xf]
  %v38 = vld [vmem:[%s5] sm:$0x1]
  %v39 = vld [vmem:[%s5 + $0x1] sm:$0x1]
  %v40 = vld [vmem:[%s1] sm:$0xf]
  %v41 = vld [vmem:[%s1 + $0x4] sm:$0xf]
  %v42 = vld [vmem:[%s1 + $0x8] sm:$0xf]
  %v43 = vld [vmem:[%s1 + $0xc] sm:$0xf]
  %v44 = vld [vmem:[%s1 + $0x10] sm:$0xf]
  %v45 = vld [vmem:[%s1 + $0x14] sm:$0xf]
  %v46 = vld [vmem:[%s1 + $0x18] sm:$0xf]
  %v47 = vld [vmem:[%s1 + $0x1c] sm:$0xf]
  %v56 = vunpack.c.l.b16 %v40
  %v57 = vunpack.c.l.b16 %v41
  %v58 = vunpack.c.l.b16 %v42
  %v59 = vunpack.c.l.b16 %v43
  %v60 = vunpack.c.l.b16 %v44
  %v61 = vunpack.c.l.b16 %v45
  %v62 = vunpack.c.l.b16 %v46
  %v63 = vunpack.c.l.b16 %v47
  %v64 = vpack.c.b16 %v57, %v56
  %v65 = vpack.c.b16 %v59, %v58
  %v66 = vpack.c.b16 %v61, %v60
  %v67 = vpack.c.b16 %v63, %v62
  %v76 = vunpack.c.l.b16 %v30
  %v77 = vunpack.c.l.b16 %v31
  %v78 = vunpack.c.l.b16 %v32
  %v79 = vunpack.c.l.b16 %v33
  %v80 = vunpack.c.l.b16 %v34
  %v81 = vunpack.c.l.b16 %v35
  %v82 = vunpack.c.l.b16 %v36
  %v83 = vunpack.c.l.b16 %v37
  %v84 = vpack.c.b16 %v77, %v76
  %v85 = vpack.c.b16 %v79, %v78
  %v86 = vpack.c.b16 %v81, %v80
  %v87 = vpack.c.b16 %v83, %v82
  %vm92 = vcmask 523264
  %v94 = vsel %vm92, %v64, 0
  %v97 = vsel %vm92, %v65, 0
  %v100 = vsel %vm92, %v66, 0
  %v103 = vsel %vm92, %v67, 0
  %105 = vmatprep.subr.bf16.mxu0 0
  %106 = vmatpush1.bf16.msra.mxu0 %v84
  %107 = vmatprep.subr.bf16.mxu0 0
  %108 = vmatpush1.bf16.msra.mxu0 %v85
  %109 = vmatprep.subr.bf16.mxu0 0
  %110 = vmatpush1.bf16.msra.mxu0 %v86
  %111 = vmatprep.subr.bf16.mxu0 0
  %112 = vmatpush1.bf16.msra.mxu0 %v87
  %113 = vmatprep.subr.bf16.mxu0 0
  %114 = vmatpush1.bf16.msra.mxu0 0
  %115 = vmatprep.subr.bf16.mxu0 0
  %116 = vmatpush1.bf16.msra.mxu0 0
  %117 = vmatprep.subr.bf16.mxu0 0
  %118 = vmatpush1.bf16.msra.mxu0 0
  %119 = vmatprep.subr.bf16.mxu0 0
  %120 = vmatpush1.bf16.msra.mxu0 0
  %121 = vmatprep.subr.bf16.mxu0 0
  %122 = vmatpush1.bf16.msra.mxu0 0
  %123 = vmatprep.subr.bf16.mxu0 0
  %124 = vmatpush1.bf16.msra.mxu0 0
  %125 = vmatprep.subr.bf16.mxu0 0
  %126 = vmatpush1.bf16.msra.mxu0 0
  %127 = vmatprep.subr.bf16.mxu0 0
  %128 = vmatpush1.bf16.msra.mxu0 0
  %129 = vmatprep.subr.bf16.mxu0 0
  %130 = vmatpush1.bf16.msra.mxu0 0
  %131 = vmatprep.subr.bf16.mxu0 0
  %132 = vmatpush1.bf16.msra.mxu0 0
  %133 = vmatprep.subr.bf16.mxu0 0
  %134 = vmatpush1.bf16.msra.mxu0 0
  %135 = vmatprep.subr.bf16.mxu0 0
  %136 = vmatpush1.bf16.msra.mxu0 0
  %137 = vmatprep.mubr.bf16.mxu0 0
  %138 = vmatmul.mubr.bf16.gmra.mrb[0].mxu0 %v94
  %v139 = vpop.f32.mrb[0].mxu0
  %v140 = vadd.f32 0.0, %v139
  %v141 = vpop.f32.mrb[0].mxu0
  %v142 = vpop.f32.mrb[0].mxu0
  %v143 = vadd.f32 0.0, %v142
  %v144 = vpop.f32.mrb[0].mxu0
  %145 = vmatprep.mubr.bf16.mxu0 0
  %146 = vmatmul.mubr.bf16.gmra.mrb[0].mxu0 %v97
  %v147 = vpop.f32.mrb[0].mxu0
  %v148 = vadd.f32 0.0, %v147
  %v149 = vpop.f32.mrb[0].mxu0
  %v150 = vpop.f32.mrb[0].mxu0
  %v151 = vadd.f32 0.0, %v150
  %v152 = vpop.f32.mrb[0].mxu0
  %153 = vmatprep.mubr.bf16.mxu0 0
  %154 = vmatmul.mubr.bf16.gmra.mrb[0].mxu0 %v100
  %v155 = vpop.f32.mrb[0].mxu0
  %v156 = vadd.f32 0.0, %v155
  %v157 = vpop.f32.mrb[0].mxu0
  %v158 = vpop.f32.mrb[0].mxu0
  %v159 = vadd.f32 0.0, %v158
  %v160 = vpop.f32.mrb[0].mxu0
  %161 = vmatprep.mubr.bf16.mxu0 0
  %162 = vmatmul.mubr.bf16.gmra.mrb[0].mxu0 %v103
  %v163 = vpop.f32.mrb[0].mxu0
  %v164 = vadd.f32 0.0, %v163
  %v165 = vpop.f32.mrb[0].mxu0
  %v166 = vpop.f32.mrb[0].mxu0
  %v167 = vadd.f32 0.0, %v166
  %v168 = vpop.f32.mrb[0].mxu0
  %169 = vdwg.mxu0
  %s170 = scalar_lea.vmem %s1, 32
  %v171 = vld [vmem:[%s170] sm:$0xf]
  %v172 = vld [vmem:[%s170 + $0x4] sm:$0xf]
  %v173 = vld [vmem:[%s170 + $0x8] sm:$0xf]
  %v174 = vld [vmem:[%s170 + $0xc] sm:$0xf]
  %v175 = vld [vmem:[%s170 + $0x10] sm:$0xf]
  %v176 = vld [vmem:[%s170 + $0x14] sm:$0xf]
  %v177 = vld [vmem:[%s170 + $0x18] sm:$0xf]
  %v178 = vld [vmem:[%s170 + $0x1c] sm:$0xf]
  %v187 = vunpack.c.l.b16 %v171
  %v188 = vunpack.c.l.b16 %v172
  %v189 = vunpack.c.l.b16 %v173
  %v190 = vunpack.c.l.b16 %v174
  %v191 = vunpack.c.l.b16 %v175
  %v192 = vunpack.c.l.b16 %v176
  %v193 = vunpack.c.l.b16 %v177
  %v194 = vunpack.c.l.b16 %v178
  %v195 = vpack.c.b16 %v188, %v187
  %v196 = vpack.c.b16 %v190, %v189
  %v197 = vpack.c.b16 %v192, %v191
  %v198 = vpack.c.b16 %v194, %v193
  %v200 = vsel %vm92, %v195, 0
  %v203 = vsel %vm92, %v196, 0
  %v206 = vsel %vm92, %v197, 0
  %v209 = vsel %vm92, %v198, 0
  %211 = vmatprep.subr.bf16.mxu0 0
  %212 = vmatpush1.bf16.msra.mxu0 %v84
  %213 = vmatprep.subr.bf16.mxu0 0
  %214 = vmatpush1.bf16.msra.mxu0 %v85
  %215 = vmatprep.subr.bf16.mxu0 0
  %216 = vmatpush1.bf16.msra.mxu0 %v86
  %217 = vmatprep.subr.bf16.mxu0 0
  %218 = vmatpush1.bf16.msra.mxu0 %v87
  %219 = vmatprep.subr.bf16.mxu0 0
  %220 = vmatpush1.bf16.msra.mxu0 0
  %221 = vmatprep.subr.bf16.mxu0 0
  %222 = vmatpush1.bf16.msra.mxu0 0
  %223 = vmatprep.subr.bf16.mxu0 0
  %224 = vmatpush1.bf16.msra.mxu0 0
  %225 = vmatprep.subr.bf16.mxu0 0
  %226 = vmatpush1.bf16.msra.mxu0 0
  %227 = vmatprep.subr.bf16.mxu0 0
  %228 = vmatpush1.bf16.msra.mxu0 0
  %229 = vmatprep.subr.bf16.mxu0 0
  %230 = vmatpush1.bf16.msra.mxu0 0
  %231 = vmatprep.subr.bf16.mxu0 0
  %232 = vmatpush1.bf16.msra.mxu0 0
  %233 = vmatprep.subr.bf16.mxu0 0
  %234 = vmatpush1.bf16.msra.mxu0 0
  %235 = vmatprep.subr.bf16.mxu0 0
  %236 = vmatpush1.bf16.msra.mxu0 0
  %237 = vmatprep.subr.bf16.mxu0 0
  %238 = vmatpush1.bf16.msra.mxu0 0
  %239 = vmatprep.subr.bf16.mxu0 0
  %240 = vmatpush1.bf16.msra.mxu0 0
  %241 = vmatprep.subr.bf16.mxu0 0
  %242 = vmatpush1.bf16.msra.mxu0 0
  %243 = vmatprep.mubr.bf16.mxu0 0
  %244 = vmatmul.mubr.bf16.gmra.mrb[0].mxu0 %v200
  %v245 = vpop.f32.mrb[0].mxu0
  %v246 = vadd.f32 0.0, %v245
  %v247 = vpop.f32.mrb[0].mxu0
  %v248 = vpop.f32.mrb[0].mxu0
  %v249 = vadd.f32 0.0, %v248
  %v250 = vpop.f32.mrb[0].mxu0
  %251 = vmatprep.mubr.bf16.mxu0 0
  %252 = vmatmul.mubr.bf16.gmra.mrb[0].mxu0 %v203
  %v253 = vpop.f32.mrb[0].mxu0
  %v254 = vadd.f32 0.0, %v253
  %v255 = vpop.f32.mrb[0].mxu0
  %v256 = vpop.f32.mrb[0].mxu0
  %v257 = vadd.f32 0.0, %v256
  %v258 = vpop.f32.mrb[0].mxu0
  %259 = vmatprep.mubr.bf16.mxu0 0
  %260 = vmatmul.mubr.bf16.gmra.mrb[0].mxu0 %v206
  %v261 = vpop.f32.mrb[0].mxu0
  %v262 = vadd.f32 0.0, %v261
  %v263 = vpop.f32.mrb[0].mxu0
  %v264 = vpop.f32.mrb[0].mxu0
  %v265 = vadd.f32 0.0, %v264
  %v266 = vpop.f32.mrb[0].mxu0
  %267 = vmatprep.mubr.bf16.mxu0 0
  %268 = vmatmul.mubr.bf16.gmra.mrb[0].mxu0 %v209
  %v269 = vpop.f32.mrb[0].mxu0
  %v270 = vadd.f32 0.0, %v269
  %v271 = vpop.f32.mrb[0].mxu0
  %v272 = vpop.f32.mrb[0].mxu0
  %v273 = vadd.f32 0.0, %v272
  %v274 = vpop.f32.mrb[0].mxu0
  %275 = vdwg.mxu0
  %s276 = scalar_lea.vmem %s1, 64
  %v277 = vld [vmem:[%s276] sm:$0xf]
  %v278 = vld [vmem:[%s276 + $0x4] sm:$0xf]
  %v279 = vld [vmem:[%s276 + $0x8] sm:$0xf]
  %v280 = vld [vmem:[%s276 + $0xc] sm:$0xf]
  %v281 = vld [vmem:[%s276 + $0x10] sm:$0xf]
  %v282 = vld [vmem:[%s276 + $0x14] sm:$0xf]
  %v283 = vld [vmem:[%s276 + $0x18] sm:$0xf]
  %v284 = vld [vmem:[%s276 + $0x1c] sm:$0xf]
  %v293 = vunpack.c.l.b16 %v277
  %v294 = vunpack.c.l.b16 %v278
  %v295 = vunpack.c.l.b16 %v279
  %v296 = vunpack.c.l.b16 %v280
  %v297 = vunpack.c.l.b16 %v281
  %v298 = vunpack.c.l.b16 %v282
  %v299 = vunpack.c.l.b16 %v283
  %v300 = vunpack.c.l.b16 %v284
  %v301 = vpack.c.b16 %v294, %v293
  %v302 = vpack.c.b16 %v296, %v295
  %v303 = vpack.c.b16 %v298, %v297
  %v304 = vpack.c.b16 %v300, %v299
  %v306 = vsel %vm92, %v301, 0
  %v309 = vsel %vm92, %v302, 0
  %v312 = vsel %vm92, %v303, 0
  %v315 = vsel %vm92, %v304, 0
  %317 = vmatprep.subr.bf16.mxu0 0
  %318 = vmatpush1.bf16.msra.mxu0 %v84
  %319 = vmatprep.subr.bf16.mxu0 0
  %320 = vmatpush1.bf16.msra.mxu0 %v85
  %321 = vmatprep.subr.bf16.mxu0 0
  %322 = vmatpush1.bf16.msra.mxu0 %v86
  %323 = vmatprep.subr.bf16.mxu0 0
  %324 = vmatpush1.bf16.msra.mxu0 %v87
  %325 = vmatprep.subr.bf16.mxu0 0
  %326 = vmatpush1.bf16.msra.mxu0 0
  %327 = vmatprep.subr.bf16.mxu0 0
  %328 = vmatpush1.bf16.msra.mxu0 0
  %329 = vmatprep.subr.bf16.mxu0 0
  %330 = vmatpush1.bf16.msra.mxu0 0
  %331 = vmatprep.subr.bf16.mxu0 0
  %332 = vmatpush1.bf16.msra.mxu0 0
  %333 = vmatprep.subr.bf16.mxu0 0
  %334 = vmatpush1.bf16.msra.mxu0 0
  %335 = vmatprep.subr.bf16.mxu0 0
  %336 = vmatpush1.bf16.msra.mxu0 0
  %337 = vmatprep.subr.bf16.mxu0 0
  %338 = vmatpush1.bf16.msra.mxu0 0
  %339 = vmatprep.subr.bf16.mxu0 0
  %340 = vmatpush1.bf16.msra.mxu0 0
  %341 = vmatprep.subr.bf16.mxu0 0
  %342 = vmatpush1.bf16.msra.mxu0 0
  %343 = vmatprep.subr.bf16.mxu0 0
  %344 = vmatpush1.bf16.msra.mxu0 0
  %345 = vmatprep.subr.bf16.mxu0 0
  %346 = vmatpush1.bf16.msra.mxu0 0
  %347 = vmatprep.subr.bf16.mxu0 0
  %348 = vmatpush1.bf16.msra.mxu0 0
  %349 = vmatprep.mubr.bf16.mxu0 0
  %350 = vmatmul.mubr.bf16.gmra.mrb[0].mxu0 %v306
  %v351 = vpop.f32.mrb[0].mxu0
  %v352 = vadd.f32 0.0, %v351
  %v353 = vpop.f32.mrb[0].mxu0
  %v354 = vpop.f32.mrb[0].mxu0
  %v355 = vadd.f32 0.0, %v354
  %v356 = vpop.f32.mrb[0].mxu0
  %357 = vmatprep.mubr.bf16.mxu0 0
  %358 = vmatmul.mubr.bf16.gmra.mrb[0].mxu0 %v309
  %v359 = vpop.f32.mrb[0].mxu0
  %v360 = vadd.f32 0.0, %v359
  %v361 = vpop.f32.mrb[0].mxu0
  %v362 = vpop.f32.mrb[0].mxu0
  %v363 = vadd.f32 0.0, %v362
  %v364 = vpop.f32.mrb[0].mxu0
  %365 = vmatprep.mubr.bf16.mxu0 0
  %366 = vmatmul.mubr.bf16.gmra.mrb[0].mxu0 %v312
  %v367 = vpop.f32.mrb[0].mxu0
  %v368 = vadd.f32 0.0, %v367
  %v369 = vpop.f32.mrb[0].mxu0
  %v370 = vpop.f32.mrb[0].mxu0
  %v371 = vadd.f32 0.0, %v370
  %v372 = vpop.f32.mrb[0].mxu0
  %373 = vmatprep.mubr.bf16.mxu0 0
  %374 = vmatmul.mubr.bf16.gmra.mrb[0].mxu0 %v315
  %v375 = vpop.f32.mrb[0].mxu0
  %v376 = vadd.f32 0.0, %v375
  %v377 = vpop.f32.mrb[0].mxu0
  %v378 = vpop.f32.mrb[0].mxu0
  %v379 = vadd.f32 0.0, %v378
  %v380 = vpop.f32.mrb[0].mxu0
  %381 = vdwg.mxu0
  %vm382 = vcmask 1047808
  %383 = vrot.lane.b32.xlu0 %v140, 32
  %v384 = vpop.permute.xlu0 %383
  %v385 = vsel %vm382, %v384, %v140
  %386 = vrot.lane.b32.xlu0 %v143, 32
  %v387 = vpop.permute.xlu0 %386
  %v388 = vsel %vm382, %v387, %v143
  %389 = vrot.lane.b32.xlu0 %v148, 32
  %v390 = vpop.permute.xlu0 %389
  %v391 = vsel %vm382, %v390, %v148
  %392 = vrot.lane.b32.xlu0 %v151, 32
  %v393 = vpop.permute.xlu0 %392
  %v394 = vsel %vm382, %v393, %v151
  %395 = vrot.lane.b32.xlu0 %v156, 32
  %v396 = vpop.permute.xlu0 %395
  %v397 = vsel %vm382, %v396, %v156
  %398 = vrot.lane.b32.xlu0 %v159, 32
  %v399 = vpop.permute.xlu0 %398
  %v400 = vsel %vm382, %v399, %v159
  %401 = vrot.lane.b32.xlu0 %v164, 32
  %v402 = vpop.permute.xlu0 %401
  %v403 = vsel %vm382, %v402, %v164
  %404 = vrot.lane.b32.xlu0 %v167, 32
  %v405 = vpop.permute.xlu0 %404
  %v406 = vsel %vm382, %v405, %v167
  %407 = vrot.lane.b32.xlu0 %v385, 32
  %v408 = vpop.permute.xlu0 %407
  %409 = vrot.lane.b32.xlu0 %v388, 32
  %v410 = vpop.permute.xlu0 %409
  %411 = vrot.lane.b32.xlu0 %v391, 32
  %v412 = vpop.permute.xlu0 %411
  %413 = vrot.lane.b32.xlu0 %v394, 32
  %v414 = vpop.permute.xlu0 %413
  %415 = vrot.lane.b32.xlu0 %v397, 32
  %v416 = vpop.permute.xlu0 %415
  %417 = vrot.lane.b32.xlu0 %v400, 32
  %v418 = vpop.permute.xlu0 %417
  %419 = vrot.lane.b32.xlu0 %v403, 32
  %v420 = vpop.permute.xlu0 %419
  %421 = vrot.lane.b32.xlu0 %v406, 32
  %v422 = vpop.permute.xlu0 %421
  %v423 = vsel %vm382, %v408, %v140
  %v424 = vsel %vm382, %v410, %v143
  %v425 = vsel %vm382, %v412, %v148
  %v426 = vsel %vm382, %v414, %v151
  %v427 = vsel %vm382, %v416, %v156
  %v428 = vsel %vm382, %v418, %v159
  %v429 = vsel %vm382, %v420, %v164
  %v430 = vsel %vm382, %v422, %v167
  %v431 = vlaneseq
  %v432 = vshrl.u32 %v431, 7
  %v433 = vsub.s32 0, %v432
  %v434 = vrot.slane %v38, %v433
  %436 = vrot.lane.b32.xlu0 %v434, 31
  %v437 = vpop.permute.xlu0 %436
  %v439 = vmul.f32 %v423, %v437
  %v440 = vmul.f32 %v424, %v437
  %v441 = vmul.f32 %v425, %v437
  %v442 = vmul.f32 %v426, %v437
  %v443 = vmul.f32 %v427, %v437
  %v444 = vmul.f32 %v428, %v437
  %v445 = vmul.f32 %v429, %v437
  %v446 = vmul.f32 %v430, %v437
  %455 = vrot.lane.b32.xlu0 %v246, 31
  %v456 = vpop.permute.xlu0 %455
  %457 = vrot.lane.b32.xlu0 %v249, 31
  %v458 = vpop.permute.xlu0 %457
  %459 = vrot.lane.b32.xlu0 %v254, 31
  %v460 = vpop.permute.xlu0 %459
  %461 = vrot.lane.b32.xlu0 %v257, 31
  %v462 = vpop.permute.xlu0 %461
  %463 = vrot.lane.b32.xlu0 %v262, 31
  %v464 = vpop.permute.xlu0 %463
  %465 = vrot.lane.b32.xlu0 %v265, 31
  %v466 = vpop.permute.xlu0 %465
  %467 = vrot.lane.b32.xlu0 %v270, 31
  %v468 = vpop.permute.xlu0 %467
  %469 = vrot.lane.b32.xlu0 %v273, 31
  %v470 = vpop.permute.xlu0 %469
  %v479 = vadd.f32 %v439, %v456
  %v480 = vadd.f32 %v440, %v458
  %v481 = vadd.f32 %v441, %v460
  %v482 = vadd.f32 %v442, %v462
  %v483 = vadd.f32 %v443, %v464
  %v484 = vadd.f32 %v444, %v466
  %v485 = vadd.f32 %v445, %v468
  %v486 = vadd.f32 %v446, %v470
  %487 = vrot.lane.b32.xlu0 %v352, 32
  %v488 = vpop.permute.xlu0 %487
  %v489 = vsel %vm382, %v488, %v352
  %490 = vrot.lane.b32.xlu0 %v355, 32
  %v491 = vpop.permute.xlu0 %490
  %v492 = vsel %vm382, %v491, %v355
  %493 = vrot.lane.b32.xlu0 %v360, 32
  %v494 = vpop.permute.xlu0 %493
  %v495 = vsel %vm382, %v494, %v360
  %496 = vrot.lane.b32.xlu0 %v363, 32
  %v497 = vpop.permute.xlu0 %496
  %v498 = vsel %vm382, %v497, %v363
  %499 = vrot.lane.b32.xlu0 %v368, 32
  %v500 = vpop.permute.xlu0 %499
  %v501 = vsel %vm382, %v500, %v368
  %502 = vrot.lane.b32.xlu0 %v371, 32
  %v503 = vpop.permute.xlu0 %502
  %v504 = vsel %vm382, %v503, %v371
  %505 = vrot.lane.b32.xlu0 %v376, 32
  %v506 = vpop.permute.xlu0 %505
  %v507 = vsel %vm382, %v506, %v376
  %508 = vrot.lane.b32.xlu0 %v379, 32
  %v509 = vpop.permute.xlu0 %508
  %v510 = vsel %vm382, %v509, %v379
  %511 = vrot.lane.b32.xlu0 %v489, 32
  %v512 = vpop.permute.xlu0 %511
  %513 = vrot.lane.b32.xlu0 %v492, 32
  %v514 = vpop.permute.xlu0 %513
  %515 = vrot.lane.b32.xlu0 %v495, 32
  %v516 = vpop.permute.xlu0 %515
  %517 = vrot.lane.b32.xlu0 %v498, 32
  %v518 = vpop.permute.xlu0 %517
  %519 = vrot.lane.b32.xlu0 %v501, 32
  %v520 = vpop.permute.xlu0 %519
  %521 = vrot.lane.b32.xlu0 %v504, 32
  %v522 = vpop.permute.xlu0 %521
  %523 = vrot.lane.b32.xlu0 %v507, 32
  %v524 = vpop.permute.xlu0 %523
  %525 = vrot.lane.b32.xlu0 %v510, 32
  %v526 = vpop.permute.xlu0 %525
  %v527 = vsel %vm382, %v512, %v352
  %v528 = vsel %vm382, %v514, %v355
  %v529 = vsel %vm382, %v516, %v360
  %v530 = vsel %vm382, %v518, %v363
  %v531 = vsel %vm382, %v520, %v368
  %v532 = vsel %vm382, %v522, %v371
  %v533 = vsel %vm382, %v524, %v376
  %v534 = vsel %vm382, %v526, %v379
  %v535 = vlaneseq
  %v536 = vshrl.u32 %v535, 7
  %v537 = vsub.s32 0, %v536
  %v538 = vrot.slane %v39, %v537
  %540 = vrot.lane.b32.xlu0 %v538, 1
  %v541 = vpop.permute.xlu0 %540
  %v543 = vmul.f32 %v527, %v541
  %v544 = vmul.f32 %v528, %v541
  %v545 = vmul.f32 %v529, %v541
  %v546 = vmul.f32 %v530, %v541
  %v547 = vmul.f32 %v531, %v541
  %v548 = vmul.f32 %v532, %v541
  %v549 = vmul.f32 %v533, %v541
  %v550 = vmul.f32 %v534, %v541
  %559 = vrot.lane.b32.xlu0 %v543, 30
  %v560 = vpop.permute.xlu0 %559
  %561 = vrot.lane.b32.xlu0 %v544, 30
  %v562 = vpop.permute.xlu0 %561
  %563 = vrot.lane.b32.xlu0 %v545, 30
  %v564 = vpop.permute.xlu0 %563
  %565 = vrot.lane.b32.xlu0 %v546, 30
  %v566 = vpop.permute.xlu0 %565
  %567 = vrot.lane.b32.xlu0 %v547, 30
  %v568 = vpop.permute.xlu0 %567
  %569 = vrot.lane.b32.xlu0 %v548, 30
  %v570 = vpop.permute.xlu0 %569
  %571 = vrot.lane.b32.xlu0 %v549, 30
  %v572 = vpop.permute.xlu0 %571
  %573 = vrot.lane.b32.xlu0 %v550, 30
  %v574 = vpop.permute.xlu0 %573
  %v583 = vadd.f32 %v479, %v560
  %v584 = vadd.f32 %v480, %v562
  %v585 = vadd.f32 %v481, %v564
  %v586 = vadd.f32 %v482, %v566
  %v587 = vadd.f32 %v483, %v568
  %v588 = vadd.f32 %v484, %v570
  %v589 = vadd.f32 %v485, %v572
  %v590 = vadd.f32 %v486, %v574
  %v591 = vld [vmem:[%s2] sm:$0xff]
  %v592 = vld [vmem:[%s2 + $0x8] sm:$0xff]
  %v593 = vld [vmem:[%s2 + $0x10] sm:$0xff]
  %v594 = vld [vmem:[%s2 + $0x18] sm:$0xff]
  %v595 = vld [vmem:[%s2 + $0x20] sm:$0xff]
  %v596 = vld [vmem:[%s2 + $0x28] sm:$0xff]
  %v597 = vld [vmem:[%s2 + $0x30] sm:$0xff]
  %v598 = vld [vmem:[%s2 + $0x38] sm:$0xff]
  %600 = vset.pattern.permute.xlu0 0
  %601 = vperm.xlu0 %600, %v591
  %v602 = vpop.permute.xlu0 %601
  %605 = vset.pattern.permute.xlu0 0
  %606 = vperm.xlu0 %605, %v592
  %v607 = vpop.permute.xlu0 %606
  %610 = vset.pattern.permute.xlu0 0
  %611 = vperm.xlu0 %610, %v593
  %v612 = vpop.permute.xlu0 %611
  %615 = vset.pattern.permute.xlu0 0
  %616 = vperm.xlu0 %615, %v594
  %v617 = vpop.permute.xlu0 %616
  %620 = vset.pattern.permute.xlu0 0
  %621 = vperm.xlu0 %620, %v595
  %v622 = vpop.permute.xlu0 %621
  %625 = vset.pattern.permute.xlu0 0
  %626 = vperm.xlu0 %625, %v596
  %v627 = vpop.permute.xlu0 %626
  %630 = vset.pattern.permute.xlu0 0
  %631 = vperm.xlu0 %630, %v597
  %v632 = vpop.permute.xlu0 %631
  %635 = vset.pattern.permute.xlu0 0
  %636 = vperm.xlu0 %635, %v598
  %v637 = vpop.permute.xlu0 %636
  %v639 = vmul.f32 %v583, %v602
  %v640 = vmul.f32 %v584, %v607
  %v641 = vmul.f32 %v585, %v612
  %v642 = vmul.f32 %v586, %v617
  %v643 = vmul.f32 %v587, %v622
  %v644 = vmul.f32 %v588, %v627
  %v645 = vmul.f32 %v589, %v632
  %v646 = vmul.f32 %v590, %v637
  %647 = vset.pattern.permute.xlu0 1
  %648 = vperm.xlu0 %647, %v591
  %v649 = vpop.permute.xlu0 %648
  %651 = vset.pattern.permute.xlu0 1
  %652 = vperm.xlu0 %651, %v592
  %v653 = vpop.permute.xlu0 %652
  %655 = vset.pattern.permute.xlu0 1
  %656 = vperm.xlu0 %655, %v593
  %v657 = vpop.permute.xlu0 %656
  %659 = vset.pattern.permute.xlu0 1
  %660 = vperm.xlu0 %659, %v594
  %v661 = vpop.permute.xlu0 %660
  %663 = vset.pattern.permute.xlu0 1
  %664 = vperm.xlu0 %663, %v595
  %v665 = vpop.permute.xlu0 %664
  %667 = vset.pattern.permute.xlu0 1
  %668 = vperm.xlu0 %667, %v596
  %v669 = vpop.permute.xlu0 %668
  %671 = vset.pattern.permute.xlu0 1
  %672 = vperm.xlu0 %671, %v597
  %v673 = vpop.permute.xlu0 %672
  %675 = vset.pattern.permute.xlu0 1
  %676 = vperm.xlu0 %675, %v598
  %v677 = vpop.permute.xlu0 %676
  %v679 = vadd.f32 %v639, %v649
  %v680 = vadd.f32 %v640, %v653
  %v681 = vadd.f32 %v641, %v657
  %v682 = vadd.f32 %v642, %v661
  %v683 = vadd.f32 %v643, %v665
  %v684 = vadd.f32 %v644, %v669
  %v685 = vadd.f32 %v645, %v673
  %v686 = vadd.f32 %v646, %v677
  %v687 = vmul.f32 %v679, 0.2
  %v688 = vmul.f32 %v680, 0.2
  %v689 = vmul.f32 %v681, 0.2
  %v690 = vmul.f32 %v682, 0.2
  %v691 = vmul.f32 %v683, 0.2
  %v692 = vmul.f32 %v684, 0.2
  %v693 = vmul.f32 %v685, 0.2
  %v694 = vmul.f32 %v686, 0.2
  %v695 = vmax.f32 %v679, %v687
  %v696 = vmax.f32 %v680, %v688
  %v697 = vmax.f32 %v681, %v689
  %v698 = vmax.f32 %v682, %v690
  %v699 = vmax.f32 %v683, %v691
  %v700 = vmax.f32 %v684, %v692
  %v701 = vmax.f32 %v685, %v693
  %v702 = vmax.f32 %v686, %v694
  %711 = vrot.lane.b32.xlu0 %v695, 97
  %v712 = vpop.permute.xlu0 %711
  %713 = vrot.lane.b32.xlu0 %v696, 97
  %v714 = vpop.permute.xlu0 %713
  %715 = vrot.lane.b32.xlu0 %v697, 97
  %v716 = vpop.permute.xlu0 %715
  %717 = vrot.lane.b32.xlu0 %v698, 97
  %v718 = vpop.permute.xlu0 %717
  %719 = vrot.lane.b32.xlu0 %v699, 97
  %v720 = vpop.permute.xlu0 %719
  %721 = vrot.lane.b32.xlu0 %v700, 97
  %v722 = vpop.permute.xlu0 %721
  %723 = vrot.lane.b32.xlu0 %v701, 97
  %v724 = vpop.permute.xlu0 %723
  %725 = vrot.lane.b32.xlu0 %v702, 97
  %v726 = vpop.permute.xlu0 %725
  %735 = vrot.lane.b32.xlu0 %v712, 32
  %v736 = vpop.permute.xlu0 %735
  %v737 = vsel %vm382, %v736, %v712
  %738 = vrot.lane.b32.xlu0 %v714, 32
  %v739 = vpop.permute.xlu0 %738
  %v740 = vsel %vm382, %v739, %v714
  %741 = vrot.lane.b32.xlu0 %v716, 32
  %v742 = vpop.permute.xlu0 %741
  %v743 = vsel %vm382, %v742, %v716
  %744 = vrot.lane.b32.xlu0 %v718, 32
  %v745 = vpop.permute.xlu0 %744
  %v746 = vsel %vm382, %v745, %v718
  %747 = vrot.lane.b32.xlu0 %v720, 32
  %v748 = vpop.permute.xlu0 %747
  %v749 = vsel %vm382, %v748, %v720
  %750 = vrot.lane.b32.xlu0 %v722, 32
  %v751 = vpop.permute.xlu0 %750
  %v752 = vsel %vm382, %v751, %v722
  %753 = vrot.lane.b32.xlu0 %v724, 32
  %v754 = vpop.permute.xlu0 %753
  %v755 = vsel %vm382, %v754, %v724
  %756 = vrot.lane.b32.xlu0 %v726, 32
  %v757 = vpop.permute.xlu0 %756
  %v758 = vsel %vm382, %v757, %v726
  %759 = vrot.lane.b32.xlu0 %v737, 32
  %v760 = vpop.permute.xlu0 %759
  %761 = vrot.lane.b32.xlu0 %v740, 32
  %v762 = vpop.permute.xlu0 %761
  %763 = vrot.lane.b32.xlu0 %v743, 32
  %v764 = vpop.permute.xlu0 %763
  %765 = vrot.lane.b32.xlu0 %v746, 32
  %v766 = vpop.permute.xlu0 %765
  %767 = vrot.lane.b32.xlu0 %v749, 32
  %v768 = vpop.permute.xlu0 %767
  %769 = vrot.lane.b32.xlu0 %v752, 32
  %v770 = vpop.permute.xlu0 %769
  %771 = vrot.lane.b32.xlu0 %v755, 32
  %v772 = vpop.permute.xlu0 %771
  %773 = vrot.lane.b32.xlu0 %v758, 32
  %v774 = vpop.permute.xlu0 %773
  %v775 = vsel %vm382, %v760, %v712
  %v776 = vsel %vm382, %v762, %v714
  %v777 = vsel %vm382, %v764, %v716
  %v778 = vsel %vm382, %v766, %v718
  %v779 = vsel %vm382, %v768, %v720
  %v780 = vsel %vm382, %v770, %v722
  %v781 = vsel %vm382, %v772, %v724
  %v782 = vsel %vm382, %v774, %v726
  %v783 = vmul.f32 %v775, %v437
  %v784 = vmul.f32 %v776, %v437
  %v785 = vmul.f32 %v777, %v437
  %v786 = vmul.f32 %v778, %v437
  %v787 = vmul.f32 %v779, %v437
  %v788 = vmul.f32 %v780, %v437
  %v789 = vmul.f32 %v781, %v437
  %v790 = vmul.f32 %v782, %v437
  %791 = vset.pattern.permute.xlu0 2
  %792 = vperm.xlu0 %791, %v591
  %v793 = vpop.permute.xlu0 %792
  %795 = vset.pattern.permute.xlu0 2
  %796 = vperm.xlu0 %795, %v592
  %v797 = vpop.permute.xlu0 %796
  %799 = vset.pattern.permute.xlu0 2
  %800 = vperm.xlu0 %799, %v593
  %v801 = vpop.permute.xlu0 %800
  %803 = vset.pattern.permute.xlu0 2
  %804 = vperm.xlu0 %803, %v594
  %v805 = vpop.permute.xlu0 %804
  %807 = vset.pattern.permute.xlu0 2
  %808 = vperm.xlu0 %807, %v595
  %v809 = vpop.permute.xlu0 %808
  %811 = vset.pattern.permute.xlu0 2
  %812 = vperm.xlu0 %811, %v596
  %v813 = vpop.permute.xlu0 %812
  %815 = vset.pattern.permute.xlu0 2
  %816 = vperm.xlu0 %815, %v597
  %v817 = vpop.permute.xlu0 %816
  %819 = vset.pattern.permute.xlu0 2
  %820 = vperm.xlu0 %819, %v598
  %v821 = vpop.permute.xlu0 %820
  %v823 = vmul.f32 %v793, %v783
  %v824 = vmul.f32 %v797, %v784
  %v825 = vmul.f32 %v801, %v785
  %v826 = vmul.f32 %v805, %v786
  %v827 = vmul.f32 %v809, %v787
  %v828 = vmul.f32 %v813, %v788
  %v829 = vmul.f32 %v817, %v789
  %v830 = vmul.f32 %v821, %v790
  %831 = vset.pattern.permute.xlu0 3
  %832 = vperm.xlu0 %831, %v591
  %v833 = vpop.permute.xlu0 %832
  %835 = vset.pattern.permute.xlu0 3
  %836 = vperm.xlu0 %835, %v592
  %v837 = vpop.permute.xlu0 %836
  %839 = vset.pattern.permute.xlu0 3
  %840 = vperm.xlu0 %839, %v593
  %v841 = vpop.permute.xlu0 %840
  %843 = vset.pattern.permute.xlu0 3
  %844 = vperm.xlu0 %843, %v594
  %v845 = vpop.permute.xlu0 %844
  %847 = vset.pattern.permute.xlu0 3
  %848 = vperm.xlu0 %847, %v595
  %v849 = vpop.permute.xlu0 %848
  %851 = vset.pattern.permute.xlu0 3
  %852 = vperm.xlu0 %851, %v596
  %v853 = vpop.permute.xlu0 %852
  %855 = vset.pattern.permute.xlu0 3
  %856 = vperm.xlu0 %855, %v597
  %v857 = vpop.permute.xlu0 %856
  %859 = vset.pattern.permute.xlu0 3
  %860 = vperm.xlu0 %859, %v598
  %v861 = vpop.permute.xlu0 %860
  %v863 = vmul.f32 %v833, %v695
  %v864 = vmul.f32 %v837, %v696
  %v865 = vmul.f32 %v841, %v697
  %v866 = vmul.f32 %v845, %v698
  %v867 = vmul.f32 %v849, %v699
  %v868 = vmul.f32 %v853, %v700
  %v869 = vmul.f32 %v857, %v701
  %v870 = vmul.f32 %v861, %v702
  %v871 = vadd.f32 %v823, %v863
  %v872 = vadd.f32 %v824, %v864
  %v873 = vadd.f32 %v825, %v865
  %v874 = vadd.f32 %v826, %v866
  %v875 = vadd.f32 %v827, %v867
  %v876 = vadd.f32 %v828, %v868
  %v877 = vadd.f32 %v829, %v869
  %v878 = vadd.f32 %v830, %v870
  %v879 = vmul.f32 %v775, %v541
  %v880 = vmul.f32 %v776, %v541
  %v881 = vmul.f32 %v777, %v541
  %v882 = vmul.f32 %v778, %v541
  %v883 = vmul.f32 %v779, %v541
  %v884 = vmul.f32 %v780, %v541
  %v885 = vmul.f32 %v781, %v541
  %v886 = vmul.f32 %v782, %v541
  %887 = vset.pattern.permute.xlu0 4
  %888 = vperm.xlu0 %887, %v591
  %v889 = vpop.permute.xlu0 %888
  %891 = vset.pattern.permute.xlu0 4
  %892 = vperm.xlu0 %891, %v592
  %v893 = vpop.permute.xlu0 %892
  %895 = vset.pattern.permute.xlu0 4
  %896 = vperm.xlu0 %895, %v593
  %v897 = vpop.permute.xlu0 %896
  %899 = vset.pattern.permute.xlu0 4
  %900 = vperm.xlu0 %899, %v594
  %v901 = vpop.permute.xlu0 %900
  %903 = vset.pattern.permute.xlu0 4
  %904 = vperm.xlu0 %903, %v595
  %v905 = vpop.permute.xlu0 %904
  %907 = vset.pattern.permute.xlu0 4
  %908 = vperm.xlu0 %907, %v596
  %v909 = vpop.permute.xlu0 %908
  %911 = vset.pattern.permute.xlu0 4
  %912 = vperm.xlu0 %911, %v597
  %v913 = vpop.permute.xlu0 %912
  %915 = vset.pattern.permute.xlu0 4
  %916 = vperm.xlu0 %915, %v598
  %v917 = vpop.permute.xlu0 %916
  %v919 = vmul.f32 %v889, %v879
  %v920 = vmul.f32 %v893, %v880
  %v921 = vmul.f32 %v897, %v881
  %v922 = vmul.f32 %v901, %v882
  %v923 = vmul.f32 %v905, %v883
  %v924 = vmul.f32 %v909, %v884
  %v925 = vmul.f32 %v913, %v885
  %v926 = vmul.f32 %v917, %v886
  %935 = vrot.lane.b32.xlu0 %v919, 30
  %v936 = vpop.permute.xlu0 %935
  %937 = vrot.lane.b32.xlu0 %v920, 30
  %v938 = vpop.permute.xlu0 %937
  %939 = vrot.lane.b32.xlu0 %v921, 30
  %v940 = vpop.permute.xlu0 %939
  %941 = vrot.lane.b32.xlu0 %v922, 30
  %v942 = vpop.permute.xlu0 %941
  %943 = vrot.lane.b32.xlu0 %v923, 30
  %v944 = vpop.permute.xlu0 %943
  %945 = vrot.lane.b32.xlu0 %v924, 30
  %v946 = vpop.permute.xlu0 %945
  %947 = vrot.lane.b32.xlu0 %v925, 30
  %v948 = vpop.permute.xlu0 %947
  %949 = vrot.lane.b32.xlu0 %v926, 30
  %v950 = vpop.permute.xlu0 %949
  %v959 = vadd.f32 %v871, %v936
  %v960 = vadd.f32 %v872, %v938
  %v961 = vadd.f32 %v873, %v940
  %v962 = vadd.f32 %v874, %v942
  %v963 = vadd.f32 %v875, %v944
  %v964 = vadd.f32 %v876, %v946
  %v965 = vadd.f32 %v877, %v948
  %v966 = vadd.f32 %v878, %v950
  %967 = vset.pattern.permute.xlu0 5
  %968 = vperm.xlu0 %967, %v591
  %v969 = vpop.permute.xlu0 %968
  %971 = vset.pattern.permute.xlu0 5
  %972 = vperm.xlu0 %971, %v592
  %v973 = vpop.permute.xlu0 %972
  %975 = vset.pattern.permute.xlu0 5
  %976 = vperm.xlu0 %975, %v593
  %v977 = vpop.permute.xlu0 %976
  %979 = vset.pattern.permute.xlu0 5
  %980 = vperm.xlu0 %979, %v594
  %v981 = vpop.permute.xlu0 %980
  %983 = vset.pattern.permute.xlu0 5
  %984 = vperm.xlu0 %983, %v595
  %v985 = vpop.permute.xlu0 %984
  %987 = vset.pattern.permute.xlu0 5
  %988 = vperm.xlu0 %987, %v596
  %v989 = vpop.permute.xlu0 %988
  %991 = vset.pattern.permute.xlu0 5
  %992 = vperm.xlu0 %991, %v597
  %v993 = vpop.permute.xlu0 %992
  %995 = vset.pattern.permute.xlu0 5
  %996 = vperm.xlu0 %995, %v598
  %v997 = vpop.permute.xlu0 %996
  %v999 = vmul.f32 %v959, %v969
  %v1000 = vmul.f32 %v960, %v973
  %v1001 = vmul.f32 %v961, %v977
  %v1002 = vmul.f32 %v962, %v981
  %v1003 = vmul.f32 %v963, %v985
  %v1004 = vmul.f32 %v964, %v989
  %v1005 = vmul.f32 %v965, %v993
  %v1006 = vmul.f32 %v966, %v997
  %1007 = vset.pattern.permute.xlu0 6
  %1008 = vperm.xlu0 %1007, %v591
  %v1009 = vpop.permute.xlu0 %1008
  %1011 = vset.pattern.permute.xlu0 6
  %1012 = vperm.xlu0 %1011, %v592
  %v1013 = vpop.permute.xlu0 %1012
  %1015 = vset.pattern.permute.xlu0 6
  %1016 = vperm.xlu0 %1015, %v593
  %v1017 = vpop.permute.xlu0 %1016
  %1019 = vset.pattern.permute.xlu0 6
  %1020 = vperm.xlu0 %1019, %v594
  %v1021 = vpop.permute.xlu0 %1020
  %1023 = vset.pattern.permute.xlu0 6
  %1024 = vperm.xlu0 %1023, %v595
  %v1025 = vpop.permute.xlu0 %1024
  %1027 = vset.pattern.permute.xlu0 6
  %1028 = vperm.xlu0 %1027, %v596
  %v1029 = vpop.permute.xlu0 %1028
  %1031 = vset.pattern.permute.xlu0 6
  %1032 = vperm.xlu0 %1031, %v597
  %v1033 = vpop.permute.xlu0 %1032
  %1035 = vset.pattern.permute.xlu0 6
  %1036 = vperm.xlu0 %1035, %v598
  %v1037 = vpop.permute.xlu0 %1036
  %v1039 = vadd.f32 %v999, %v1009
  %v1040 = vadd.f32 %v1000, %v1013
  %v1041 = vadd.f32 %v1001, %v1017
  %v1042 = vadd.f32 %v1002, %v1021
  %v1043 = vadd.f32 %v1003, %v1025
  %v1044 = vadd.f32 %v1004, %v1029
  %v1045 = vadd.f32 %v1005, %v1033
  %v1046 = vadd.f32 %v1006, %v1037
  %v1047 = vld [vmem:[%s6] sm:$0xff]
  %v1048 = vld [vmem:[%s6 + $0x8] sm:$0xff]
  %v1049 = vld [vmem:[%s6 + $0x10] sm:$0xff]
  %v1050 = vld [vmem:[%s6 + $0x18] sm:$0xff]
  %1059 = vrot.lane.b32.xlu0 %v1039, 97
  %v1060 = vpop.permute.xlu0 %1059
  %1061 = vrot.lane.b32.xlu0 %v1040, 97
  %v1062 = vpop.permute.xlu0 %1061
  %1063 = vrot.lane.b32.xlu0 %v1041, 97
  %v1064 = vpop.permute.xlu0 %1063
  %1065 = vrot.lane.b32.xlu0 %v1042, 97
  %v1066 = vpop.permute.xlu0 %1065
  %1067 = vrot.lane.b32.xlu0 %v1043, 97
  %v1068 = vpop.permute.xlu0 %1067
  %1069 = vrot.lane.b32.xlu0 %v1044, 97
  %v1070 = vpop.permute.xlu0 %1069
  %1071 = vrot.lane.b32.xlu0 %v1045, 97
  %v1072 = vpop.permute.xlu0 %1071
  %1073 = vrot.lane.b32.xlu0 %v1046, 97
  %v1074 = vpop.permute.xlu0 %1073
  %vm1075 = vcmask 261120
  %v1076 = vsel %vm1075, %v1060, 0
  %v1078 = vsel %vm1075, %v1062, 0
  %v1080 = vsel %vm1075, %v1064, 0
  %v1082 = vsel %vm1075, %v1066, 0
  %v1084 = vsel %vm1075, %v1068, 0
  %v1086 = vsel %vm1075, %v1070, 0
  %v1088 = vsel %vm1075, %v1072, 0
  %v1090 = vsel %vm1075, %v1074, 0
  %1092 = vmatprep.subr.mxu0 0.0
  %1093 = vmatpush1.msra.mxu0 %v1047
  %1094 = vmatprep.subr.mxu0 0.0
  %1095 = vmatpush1.msra.mxu0 %v1048
  %1096 = vmatprep.subr.mxu0 0.0
  %1097 = vmatpush1.msra.mxu0 %v1049
  %1098 = vmatprep.subr.mxu0 0.0
  %1099 = vmatpush1.msra.mxu0 %v1050
  %1100 = vmatprep.subr.mxu0 0.0
  %1101 = vmatpush1.msra.mxu0 0.0
  %1102 = vmatprep.subr.mxu0 0.0
  %1103 = vmatpush1.msra.mxu0 0.0
  %1104 = vmatprep.subr.mxu0 0.0
  %1105 = vmatpush1.msra.mxu0 0.0
  %1106 = vmatprep.subr.mxu0 0.0
  %1107 = vmatpush1.msra.mxu0 0.0
  %1108 = vmatprep.subr.mxu0 0.0
  %1109 = vmatpush1.msra.mxu0 0.0
  %1110 = vmatprep.subr.mxu0 0.0
  %1111 = vmatpush1.msra.mxu0 0.0
  %1112 = vmatprep.subr.mxu0 0.0
  %1113 = vmatpush1.msra.mxu0 0.0
  %1114 = vmatprep.subr.mxu0 0.0
  %1115 = vmatpush1.msra.mxu0 0.0
  %1116 = vmatprep.subr.mxu0 0.0
  %1117 = vmatpush1.msra.mxu0 0.0
  %1118 = vmatprep.subr.mxu0 0.0
  %1119 = vmatpush1.msra.mxu0 0.0
  %1120 = vmatprep.subr.mxu0 0.0
  %1121 = vmatpush1.msra.mxu0 0.0
  %1122 = vmatprep.subr.mxu0 0.0
  %1123 = vmatpush1.msra.mxu0 0.0
  %1124 = vmatprep.subr.mxu0 0.0
  %1125 = vmatpush1.msra.mxu0 0.0
  %1126 = vmatprep.subr.mxu0 0.0
  %1127 = vmatpush1.msra.mxu0 0.0
  %1128 = vmatprep.subr.mxu0 0.0
  %1129 = vmatpush1.msra.mxu0 0.0
  %1130 = vmatprep.subr.mxu0 0.0
  %1131 = vmatpush1.msra.mxu0 0.0
  %1132 = vmatprep.subr.mxu0 0.0
  %1133 = vmatpush1.msra.mxu0 0.0
  %1134 = vmatprep.subr.mxu0 0.0
  %1135 = vmatpush1.msra.mxu0 0.0
  %1136 = vmatprep.subr.mxu0 0.0
  %1137 = vmatpush1.msra.mxu0 0.0
  %1138 = vmatprep.subr.mxu0 0.0
  %1139 = vmatpush1.msra.mxu0 0.0
  %1140 = vmatprep.subr.mxu0 0.0
  %1141 = vmatpush1.msra.mxu0 0.0
  %1142 = vmatprep.subr.mxu0 0.0
  %1143 = vmatpush1.msra.mxu0 0.0
  %1144 = vmatprep.subr.mxu0 0.0
  %1145 = vmatpush1.msra.mxu0 0.0
  %1146 = vmatprep.subr.mxu0 0.0
  %1147 = vmatpush1.msra.mxu0 0.0
  %1148 = vmatprep.subr.mxu0 0.0
  %1149 = vmatpush1.msra.mxu0 0.0
  %1150 = vmatprep.subr.mxu0 0.0
  %1151 = vmatpush1.msra.mxu0 0.0
  %1152 = vmatprep.subr.mxu0 0.0
  %1153 = vmatpush1.msra.mxu0 0.0
  %1154 = vmatprep.subr.mxu0 0.0
  %1155 = vmatpush1.msra.mxu0 0.0
  %1156 = vmatprep.mubr.f32.mxu0 0.0
  %1157 = vmatmul.mubr.f32.gmra.mrb[0].mxu0 %v1076
  %v1158 = vpop.f32.mrb[0].mxu0
  %v1159 = vadd.f32 0.0, %v1158
  %v1160 = vpop.f32.mrb[0].mxu0
  %1161 = vmatprep.mubr.f32.mxu0 0.0
  %1162 = vmatmul.mubr.f32.gmra.mrb[0].mxu0 %v1078
  %v1163 = vpop.f32.mrb[0].mxu0
  %v1164 = vadd.f32 0.0, %v1163
  %v1165 = vpop.f32.mrb[0].mxu0
  %1166 = vmatprep.mubr.f32.mxu0 0.0
  %1167 = vmatmul.mubr.f32.gmra.mrb[0].mxu0 %v1080
  %v1168 = vpop.f32.mrb[0].mxu0
  %v1169 = vadd.f32 0.0, %v1168
  %v1170 = vpop.f32.mrb[0].mxu0
  %1171 = vmatprep.mubr.f32.mxu0 0.0
  %1172 = vmatmul.mubr.f32.gmra.mrb[0].mxu0 %v1082
  %v1173 = vpop.f32.mrb[0].mxu0
  %v1174 = vadd.f32 0.0, %v1173
  %v1175 = vpop.f32.mrb[0].mxu0
  %1176 = vmatprep.mubr.f32.mxu0 0.0
  %1177 = vmatmul.mubr.f32.gmra.mrb[0].mxu0 %v1084
  %v1178 = vpop.f32.mrb[0].mxu0
  %v1179 = vadd.f32 0.0, %v1178
  %v1180 = vpop.f32.mrb[0].mxu0
  %1181 = vmatprep.mubr.f32.mxu0 0.0
  %1182 = vmatmul.mubr.f32.gmra.mrb[0].mxu0 %v1086
  %v1183 = vpop.f32.mrb[0].mxu0
  %v1184 = vadd.f32 0.0, %v1183
  %v1185 = vpop.f32.mrb[0].mxu0
  %1186 = vmatprep.mubr.f32.mxu0 0.0
  %1187 = vmatmul.mubr.f32.gmra.mrb[0].mxu0 %v1088
  %v1188 = vpop.f32.mrb[0].mxu0
  %v1189 = vadd.f32 0.0, %v1188
  %v1190 = vpop.f32.mrb[0].mxu0
  %1191 = vmatprep.mubr.f32.mxu0 0.0
  %1192 = vmatmul.mubr.f32.gmra.mrb[0].mxu0 %v1090
  %v1193 = vpop.f32.mrb[0].mxu0
  %v1194 = vadd.f32 0.0, %v1193
  %v1195 = vpop.f32.mrb[0].mxu0
  %1196 = vdwg.mxu0
  %v1197 = vmul.f32 %v1159, 0.0625
  %v1198 = vmul.f32 %v1164, 0.0625
  %v1199 = vmul.f32 %v1169, 0.0625
  %v1200 = vmul.f32 %v1174, 0.0625
  %v1201 = vmul.f32 %v1179, 0.0625
  %v1202 = vmul.f32 %v1184, 0.0625
  %v1203 = vmul.f32 %v1189, 0.0625
  %v1204 = vmul.f32 %v1194, 0.0625
  %v1205 = vld [vmem:[%s3] sm:$0xf]
  %v1207 = vsel %vm92, %v1205, 0
  %1209 = vmatprep.subr.mxu0 0.0
  %1210 = vmatpush1.msra.mxu0 %v1197
  %1211 = vmatprep.subr.mxu0 0.0
  %1212 = vmatpush1.msra.mxu0 %v1198
  %1213 = vmatprep.subr.mxu0 0.0
  %1214 = vmatpush1.msra.mxu0 %v1199
  %1215 = vmatprep.subr.mxu0 0.0
  %1216 = vmatpush1.msra.mxu0 %v1200
  %1217 = vmatprep.subr.mxu0 0.0
  %1218 = vmatpush1.msra.mxu0 %v1201
  %1219 = vmatprep.subr.mxu0 0.0
  %1220 = vmatpush1.msra.mxu0 %v1202
  %1221 = vmatprep.subr.mxu0 0.0
  %1222 = vmatpush1.msra.mxu0 %v1203
  %1223 = vmatprep.subr.mxu0 0.0
  %1224 = vmatpush1.msra.mxu0 %v1204
  %1225 = vmatprep.subr.mxu0 0.0
  %1226 = vmatpush1.msra.mxu0 0.0
  %1227 = vmatprep.subr.mxu0 0.0
  %1228 = vmatpush1.msra.mxu0 0.0
  %1229 = vmatprep.subr.mxu0 0.0
  %1230 = vmatpush1.msra.mxu0 0.0
  %1231 = vmatprep.subr.mxu0 0.0
  %1232 = vmatpush1.msra.mxu0 0.0
  %1233 = vmatprep.subr.mxu0 0.0
  %1234 = vmatpush1.msra.mxu0 0.0
  %1235 = vmatprep.subr.mxu0 0.0
  %1236 = vmatpush1.msra.mxu0 0.0
  %1237 = vmatprep.subr.mxu0 0.0
  %1238 = vmatpush1.msra.mxu0 0.0
  %1239 = vmatprep.subr.mxu0 0.0
  %1240 = vmatpush1.msra.mxu0 0.0
  %1241 = vmatprep.subr.mxu0 0.0
  %1242 = vmatpush1.msra.mxu0 0.0
  %1243 = vmatprep.subr.mxu0 0.0
  %1244 = vmatpush1.msra.mxu0 0.0
  %1245 = vmatprep.subr.mxu0 0.0
  %1246 = vmatpush1.msra.mxu0 0.0
  %1247 = vmatprep.subr.mxu0 0.0
  %1248 = vmatpush1.msra.mxu0 0.0
  %1249 = vmatprep.subr.mxu0 0.0
  %1250 = vmatpush1.msra.mxu0 0.0
  %1251 = vmatprep.subr.mxu0 0.0
  %1252 = vmatpush1.msra.mxu0 0.0
  %1253 = vmatprep.subr.mxu0 0.0
  %1254 = vmatpush1.msra.mxu0 0.0
  %1255 = vmatprep.subr.mxu0 0.0
  %1256 = vmatpush1.msra.mxu0 0.0
  %1257 = vmatprep.subr.mxu0 0.0
  %1258 = vmatpush1.msra.mxu0 0.0
  %1259 = vmatprep.subr.mxu0 0.0
  %1260 = vmatpush1.msra.mxu0 0.0
  %1261 = vmatprep.subr.mxu0 0.0
  %1262 = vmatpush1.msra.mxu0 0.0
  %1263 = vmatprep.subr.mxu0 0.0
  %1264 = vmatpush1.msra.mxu0 0.0
  %1265 = vmatprep.subr.mxu0 0.0
  %1266 = vmatpush1.msra.mxu0 0.0
  %1267 = vmatprep.subr.mxu0 0.0
  %1268 = vmatpush1.msra.mxu0 0.0
  %1269 = vmatprep.subr.mxu0 0.0
  %1270 = vmatpush1.msra.mxu0 0.0
  %1271 = vmatprep.subr.mxu0 0.0
  %1272 = vmatpush1.msra.mxu0 0.0
  %1273 = vmatprep.mubr.f32.mxu0 0.0
  %1274 = vmatmul.mubr.f32.gmra.mrb[0].mxu0 %v1207
  %v1275 = vpop.f32.mrb[0].mxu0
  %v1276 = vadd.f32 0.0, %v1275
  %v1277 = vpop.f32.mrb[0].mxu0
  %1278 = vdwg.mxu0
  %v1279 = vmax.f32 %v1276, 0.0
  %v1280 = vld [vmem:[%s4] sm:$0xff]
  %v1281 = vld [vmem:[%s4 + $0x8] sm:$0xff]
  %v1282 = vld [vmem:[%s4 + $0x10] sm:$0xff]
  %v1283 = vld [vmem:[%s4 + $0x18] sm:$0xff]
  %v1284 = vld [vmem:[%s4 + $0x20] sm:$0xff]
  %v1285 = vld [vmem:[%s4 + $0x28] sm:$0xff]
  %v1286 = vld [vmem:[%s4 + $0x30] sm:$0xff]
  %v1287 = vld [vmem:[%s4 + $0x38] sm:$0xff]
  %vm1288 = vcmask 31744
  %v1290 = vsel %vm1288, %v1280, 0
  %v1293 = vsel %vm1288, %v1281, 0
  %v1296 = vsel %vm1288, %v1282, 0
  %v1299 = vsel %vm1288, %v1283, 0
  %v1302 = vsel %vm1288, %v1284, 0
  %v1305 = vsel %vm1288, %v1285, 0
  %v1308 = vsel %vm1288, %v1286, 0
  %v1311 = vsel %vm1288, %v1287, 0
  %vm1313 = vcmask 1043456
  %v1315 = vsel %vm1313, %v1279, 0
  %1317 = vmatprep.subr.mxu0 0.0
  %1318 = vmatpush1.msra.mxu0 %v1315
  %1319 = vmatprep.subr.mxu0 0.0
  %1320 = vmatpush1.msra.mxu0 0.0
  %1321 = vmatprep.subr.mxu0 0.0
  %1322 = vmatpush1.msra.mxu0 0.0
  %1323 = vmatprep.subr.mxu0 0.0
  %1324 = vmatpush1.msra.mxu0 0.0
  %1325 = vmatprep.subr.mxu0 0.0
  %1326 = vmatpush1.msra.mxu0 0.0
  %1327 = vmatprep.subr.mxu0 0.0
  %1328 = vmatpush1.msra.mxu0 0.0
  %1329 = vmatprep.subr.mxu0 0.0
  %1330 = vmatpush1.msra.mxu0 0.0
  %1331 = vmatprep.subr.mxu0 0.0
  %1332 = vmatpush1.msra.mxu0 0.0
  %1333 = vmatprep.subr.mxu0 0.0
  %1334 = vmatpush1.msra.mxu0 0.0
  %1335 = vmatprep.subr.mxu0 0.0
  %1336 = vmatpush1.msra.mxu0 0.0
  %1337 = vmatprep.subr.mxu0 0.0
  %1338 = vmatpush1.msra.mxu0 0.0
  %1339 = vmatprep.subr.mxu0 0.0
  %1340 = vmatpush1.msra.mxu0 0.0
  %1341 = vmatprep.subr.mxu0 0.0
  %1342 = vmatpush1.msra.mxu0 0.0
  %1343 = vmatprep.subr.mxu0 0.0
  %1344 = vmatpush1.msra.mxu0 0.0
  %1345 = vmatprep.subr.mxu0 0.0
  %1346 = vmatpush1.msra.mxu0 0.0
  %1347 = vmatprep.subr.mxu0 0.0
  %1348 = vmatpush1.msra.mxu0 0.0
  %1349 = vmatprep.subr.mxu0 0.0
  %1350 = vmatpush1.msra.mxu0 0.0
  %1351 = vmatprep.subr.mxu0 0.0
  %1352 = vmatpush1.msra.mxu0 0.0
  %1353 = vmatprep.subr.mxu0 0.0
  %1354 = vmatpush1.msra.mxu0 0.0
  %1355 = vmatprep.subr.mxu0 0.0
  %1356 = vmatpush1.msra.mxu0 0.0
  %1357 = vmatprep.subr.mxu0 0.0
  %1358 = vmatpush1.msra.mxu0 0.0
  %1359 = vmatprep.subr.mxu0 0.0
  %1360 = vmatpush1.msra.mxu0 0.0
  %1361 = vmatprep.subr.mxu0 0.0
  %1362 = vmatpush1.msra.mxu0 0.0
  %1363 = vmatprep.subr.mxu0 0.0
  %1364 = vmatpush1.msra.mxu0 0.0
  %1365 = vmatprep.subr.mxu0 0.0
  %1366 = vmatpush1.msra.mxu0 0.0
  %1367 = vmatprep.subr.mxu0 0.0
  %1368 = vmatpush1.msra.mxu0 0.0
  %1369 = vmatprep.subr.mxu0 0.0
  %1370 = vmatpush1.msra.mxu0 0.0
  %1371 = vmatprep.subr.mxu0 0.0
  %1372 = vmatpush1.msra.mxu0 0.0
  %1373 = vmatprep.subr.mxu0 0.0
  %1374 = vmatpush1.msra.mxu0 0.0
  %1375 = vmatprep.subr.mxu0 0.0
  %1376 = vmatpush1.msra.mxu0 0.0
  %1377 = vmatprep.subr.mxu0 0.0
  %1378 = vmatpush1.msra.mxu0 0.0
  %1379 = vmatprep.subr.mxu0 0.0
  %1380 = vmatpush1.msra.mxu0 0.0
  %1381 = vmatprep.mubr.f32.mxu0 0.0
  %1382 = vmatmul.mubr.f32.gmra.mrb[0].mxu0 %v1290
  %v1383 = vpop.f32.mrb[0].mxu0
  %v1384 = vadd.f32 0.0, %v1383
  %v1385 = vpop.f32.mrb[0].mxu0
  %1386 = vmatprep.mubr.f32.mxu0 0.0
  %1387 = vmatmul.mubr.f32.gmra.mrb[0].mxu0 %v1293
  %v1388 = vpop.f32.mrb[0].mxu0
  %v1389 = vadd.f32 0.0, %v1388
  %v1390 = vpop.f32.mrb[0].mxu0
  %1391 = vmatprep.mubr.f32.mxu0 0.0
  %1392 = vmatmul.mubr.f32.gmra.mrb[0].mxu0 %v1296
  %v1393 = vpop.f32.mrb[0].mxu0
  %v1394 = vadd.f32 0.0, %v1393
  %v1395 = vpop.f32.mrb[0].mxu0
  %1396 = vmatprep.mubr.f32.mxu0 0.0
  %1397 = vmatmul.mubr.f32.gmra.mrb[0].mxu0 %v1299
  %v1398 = vpop.f32.mrb[0].mxu0
  %v1399 = vadd.f32 0.0, %v1398
  %v1400 = vpop.f32.mrb[0].mxu0
  %1401 = vmatprep.mubr.f32.mxu0 0.0
  %1402 = vmatmul.mubr.f32.gmra.mrb[0].mxu0 %v1302
  %v1403 = vpop.f32.mrb[0].mxu0
  %v1404 = vadd.f32 0.0, %v1403
  %v1405 = vpop.f32.mrb[0].mxu0
  %1406 = vmatprep.mubr.f32.mxu0 0.0
  %1407 = vmatmul.mubr.f32.gmra.mrb[0].mxu0 %v1305
  %v1408 = vpop.f32.mrb[0].mxu0
  %v1409 = vadd.f32 0.0, %v1408
  %v1410 = vpop.f32.mrb[0].mxu0
  %1411 = vmatprep.mubr.f32.mxu0 0.0
  %1412 = vmatmul.mubr.f32.gmra.mrb[0].mxu0 %v1308
  %v1413 = vpop.f32.mrb[0].mxu0
  %v1414 = vadd.f32 0.0, %v1413
  %v1415 = vpop.f32.mrb[0].mxu0
  %1416 = vmatprep.mubr.f32.mxu0 0.0
  %1417 = vmatmul.mubr.f32.gmra.mrb[0].mxu0 %v1311
  %v1418 = vpop.f32.mrb[0].mxu0
  %v1419 = vadd.f32 0.0, %v1418
  %v1420 = vpop.f32.mrb[0].mxu0
  %1421 = vdwg.mxu0
  %v1422 = vxor.u32 %v1384, 2147483648
  %v1423 = vxor.u32 %v1389, 2147483648
  %v1424 = vxor.u32 %v1394, 2147483648
  %v1425 = vxor.u32 %v1399, 2147483648
  %v1426 = vxor.u32 %v1404, 2147483648
  %v1427 = vxor.u32 %v1409, 2147483648
  %v1428 = vxor.u32 %v1414, 2147483648
  %v1429 = vxor.u32 %v1419, 2147483648
  %v1430 = vmul.f32 %v1422, 1.442695
  %v1431 = vpow.pop %v1430
  %v1432 = vmul.f32 %v1423, 1.442695
  %v1433 = vpow.pop %v1432
  %v1434 = vmul.f32 %v1424, 1.442695
  %v1435 = vpow.pop %v1434
  %v1436 = vmul.f32 %v1425, 1.442695
  %v1437 = vpow.pop %v1436
  %v1438 = vmul.f32 %v1426, 1.442695
  %v1439 = vpow.pop %v1438
  %v1440 = vmul.f32 %v1427, 1.442695
  %v1441 = vpow.pop %v1440
  %v1442 = vmul.f32 %v1428, 1.442695
  %v1443 = vpow.pop %v1442
  %v1444 = vmul.f32 %v1429, 1.442695
  %v1445 = vpow.pop %v1444
  %v1446 = vadd.f32 %v1431, 1.0
  %v1447 = vadd.f32 %v1433, 1.0
  %v1448 = vadd.f32 %v1435, 1.0
  %v1449 = vadd.f32 %v1437, 1.0
  %v1450 = vadd.f32 %v1439, 1.0
  %v1451 = vadd.f32 %v1441, 1.0
  %v1452 = vadd.f32 %v1443, 1.0
  %v1453 = vadd.f32 %v1445, 1.0
  %v1454 = vrcp.pop %v1446
  %v1455 = vmul.f32 1.0, %v1454
  %v1456 = vrcp.pop %v1447
  %v1457 = vmul.f32 1.0, %v1456
  %v1458 = vrcp.pop %v1448
  %v1459 = vmul.f32 1.0, %v1458
  %v1460 = vrcp.pop %v1449
  %v1461 = vmul.f32 1.0, %v1460
  %v1462 = vrcp.pop %v1450
  %v1463 = vmul.f32 1.0, %v1462
  %v1464 = vrcp.pop %v1451
  %v1465 = vmul.f32 1.0, %v1464
  %v1466 = vrcp.pop %v1452
  %v1467 = vmul.f32 1.0, %v1466
  %v1468 = vrcp.pop %v1453
  %v1469 = vmul.f32 1.0, %v1468
  %v1470 = vld [vmem:[%s7] sm:$0x3]
  %vm1471 = vcmask 15360
  %v1473 = vsel %vm1471, %v1455, 0
  %v1476 = vsel %vm1471, %v1457, 0
  %v1479 = vsel %vm1471, %v1459, 0
  %v1482 = vsel %vm1471, %v1461, 0
  %v1485 = vsel %vm1471, %v1463, 0
  %v1488 = vsel %vm1471, %v1465, 0
  %v1491 = vsel %vm1471, %v1467, 0
  %v1494 = vsel %vm1471, %v1469, 0
  %vm1496 = vcmask 1041408
  %v1498 = vsel %vm1496, %v1470, 0
  %1500 = vmatprep.subr.mxu0 0.0
  %1501 = vmatpush1.msra.mxu0 %v1498
  %1502 = vmatprep.subr.mxu0 0.0
  %1503 = vmatpush1.msra.mxu0 0.0
  %1504 = vmatprep.subr.mxu0 0.0
  %1505 = vmatpush1.msra.mxu0 0.0
  %1506 = vmatprep.subr.mxu0 0.0
  %1507 = vmatpush1.msra.mxu0 0.0
  %1508 = vmatprep.subr.mxu0 0.0
  %1509 = vmatpush1.msra.mxu0 0.0
  %1510 = vmatprep.subr.mxu0 0.0
  %1511 = vmatpush1.msra.mxu0 0.0
  %1512 = vmatprep.subr.mxu0 0.0
  %1513 = vmatpush1.msra.mxu0 0.0
  %1514 = vmatprep.subr.mxu0 0.0
  %1515 = vmatpush1.msra.mxu0 0.0
  %1516 = vmatprep.subr.mxu0 0.0
  %1517 = vmatpush1.msra.mxu0 0.0
  %1518 = vmatprep.subr.mxu0 0.0
  %1519 = vmatpush1.msra.mxu0 0.0
  %1520 = vmatprep.subr.mxu0 0.0
  %1521 = vmatpush1.msra.mxu0 0.0
  %1522 = vmatprep.subr.mxu0 0.0
  %1523 = vmatpush1.msra.mxu0 0.0
  %1524 = vmatprep.subr.mxu0 0.0
  %1525 = vmatpush1.msra.mxu0 0.0
  %1526 = vmatprep.subr.mxu0 0.0
  %1527 = vmatpush1.msra.mxu0 0.0
  %1528 = vmatprep.subr.mxu0 0.0
  %1529 = vmatpush1.msra.mxu0 0.0
  %1530 = vmatprep.subr.mxu0 0.0
  %1531 = vmatpush1.msra.mxu0 0.0
  %1532 = vmatprep.subr.mxu0 0.0
  %1533 = vmatpush1.msra.mxu0 0.0
  %1534 = vmatprep.subr.mxu0 0.0
  %1535 = vmatpush1.msra.mxu0 0.0
  %1536 = vmatprep.subr.mxu0 0.0
  %1537 = vmatpush1.msra.mxu0 0.0
  %1538 = vmatprep.subr.mxu0 0.0
  %1539 = vmatpush1.msra.mxu0 0.0
  %1540 = vmatprep.subr.mxu0 0.0
  %1541 = vmatpush1.msra.mxu0 0.0
  %1542 = vmatprep.subr.mxu0 0.0
  %1543 = vmatpush1.msra.mxu0 0.0
  %1544 = vmatprep.subr.mxu0 0.0
  %1545 = vmatpush1.msra.mxu0 0.0
  %1546 = vmatprep.subr.mxu0 0.0
  %1547 = vmatpush1.msra.mxu0 0.0
  %1548 = vmatprep.subr.mxu0 0.0
  %1549 = vmatpush1.msra.mxu0 0.0
  %1550 = vmatprep.subr.mxu0 0.0
  %1551 = vmatpush1.msra.mxu0 0.0
  %1552 = vmatprep.subr.mxu0 0.0
  %1553 = vmatpush1.msra.mxu0 0.0
  %1554 = vmatprep.subr.mxu0 0.0
  %1555 = vmatpush1.msra.mxu0 0.0
  %1556 = vmatprep.subr.mxu0 0.0
  %1557 = vmatpush1.msra.mxu0 0.0
  %1558 = vmatprep.subr.mxu0 0.0
  %1559 = vmatpush1.msra.mxu0 0.0
  %1560 = vmatprep.subr.mxu0 0.0
  %1561 = vmatpush1.msra.mxu0 0.0
  %1562 = vmatprep.subr.mxu0 0.0
  %1563 = vmatpush1.msra.mxu0 0.0
  %1564 = vmatprep.mubr.f32.mxu0 0.0
  %1565 = vmatmul.mubr.f32.gmra.mrb[0].mxu0 %v1473
  %v1566 = vpop.f32.mrb[0].mxu0
  %v1567 = vadd.f32 0.0, %v1566
  %v1568 = vpop.f32.mrb[0].mxu0
  %1569 = vmatprep.mubr.f32.mxu0 0.0
  %1570 = vmatmul.mubr.f32.gmra.mrb[0].mxu0 %v1476
  %v1571 = vpop.f32.mrb[0].mxu0
  %v1572 = vadd.f32 0.0, %v1571
  %v1573 = vpop.f32.mrb[0].mxu0
  %1574 = vmatprep.mubr.f32.mxu0 0.0
  %1575 = vmatmul.mubr.f32.gmra.mrb[0].mxu0 %v1479
  %v1576 = vpop.f32.mrb[0].mxu0
  %v1577 = vadd.f32 0.0, %v1576
  %v1578 = vpop.f32.mrb[0].mxu0
  %1579 = vmatprep.mubr.f32.mxu0 0.0
  %1580 = vmatmul.mubr.f32.gmra.mrb[0].mxu0 %v1482
  %v1581 = vpop.f32.mrb[0].mxu0
  %v1582 = vadd.f32 0.0, %v1581
  %v1583 = vpop.f32.mrb[0].mxu0
  %1584 = vmatprep.mubr.f32.mxu0 0.0
  %1585 = vmatmul.mubr.f32.gmra.mrb[0].mxu0 %v1485
  %v1586 = vpop.f32.mrb[0].mxu0
  %v1587 = vadd.f32 0.0, %v1586
  %v1588 = vpop.f32.mrb[0].mxu0
  %1589 = vmatprep.mubr.f32.mxu0 0.0
  %1590 = vmatmul.mubr.f32.gmra.mrb[0].mxu0 %v1488
  %v1591 = vpop.f32.mrb[0].mxu0
  %v1592 = vadd.f32 0.0, %v1591
  %v1593 = vpop.f32.mrb[0].mxu0
  %1594 = vmatprep.mubr.f32.mxu0 0.0
  %1595 = vmatmul.mubr.f32.gmra.mrb[0].mxu0 %v1491
  %v1596 = vpop.f32.mrb[0].mxu0
  %v1597 = vadd.f32 0.0, %v1596
  %v1598 = vpop.f32.mrb[0].mxu0
  %1599 = vmatprep.mubr.f32.mxu0 0.0
  %1600 = vmatmul.mubr.f32.gmra.mrb[0].mxu0 %v1494
  %v1601 = vpop.f32.mrb[0].mxu0
  %v1602 = vadd.f32 0.0, %v1601
  %v1603 = vpop.f32.mrb[0].mxu0
  %1604 = vdwg.mxu0
  %1613 = vrot.lane.b32.xlu0 %v1567, 31
  %v1614 = vpop.permute.xlu0 %1613
  %1615 = vrot.lane.b32.xlu0 %v1572, 31
  %v1616 = vpop.permute.xlu0 %1615
  %1617 = vrot.lane.b32.xlu0 %v1577, 31
  %v1618 = vpop.permute.xlu0 %1617
  %1619 = vrot.lane.b32.xlu0 %v1582, 31
  %v1620 = vpop.permute.xlu0 %1619
  %1621 = vrot.lane.b32.xlu0 %v1587, 31
  %v1622 = vpop.permute.xlu0 %1621
  %1623 = vrot.lane.b32.xlu0 %v1592, 31
  %v1624 = vpop.permute.xlu0 %1623
  %1625 = vrot.lane.b32.xlu0 %v1597, 31
  %v1626 = vpop.permute.xlu0 %1625
  %1627 = vrot.lane.b32.xlu0 %v1602, 31
  %v1628 = vpop.permute.xlu0 %1627
  %v1637 = vmul.f32 %v1039, %v1614
  %v1638 = vmul.f32 %v1040, %v1616
  %v1639 = vmul.f32 %v1041, %v1618
  %v1640 = vmul.f32 %v1042, %v1620
  %v1641 = vmul.f32 %v1043, %v1622
  %v1642 = vmul.f32 %v1044, %v1624
  %v1643 = vmul.f32 %v1045, %v1626
  %v1644 = vmul.f32 %v1046, %v1628
  %1653 = vrot.lane.b32.xlu0 %v1637, 97
  %v1654 = vpop.permute.xlu0 %1653
  %1655 = vrot.lane.b32.xlu0 %v1638, 97
  %v1656 = vpop.permute.xlu0 %1655
  %1657 = vrot.lane.b32.xlu0 %v1639, 97
  %v1658 = vpop.permute.xlu0 %1657
  %1659 = vrot.lane.b32.xlu0 %v1640, 97
  %v1660 = vpop.permute.xlu0 %1659
  %1661 = vrot.lane.b32.xlu0 %v1641, 97
  %v1662 = vpop.permute.xlu0 %1661
  %1663 = vrot.lane.b32.xlu0 %v1642, 97
  %v1664 = vpop.permute.xlu0 %1663
  %1665 = vrot.lane.b32.xlu0 %v1643, 97
  %v1666 = vpop.permute.xlu0 %1665
  %1667 = vrot.lane.b32.xlu0 %v1644, 97
  %v1668 = vpop.permute.xlu0 %1667
  %1677 = vst.msk [vmem:[%s8] sm:$0xff] %vm1075, %v1654
  %1678 = vst.msk [vmem:[%s8 + $0x8] sm:$0xff] %vm1075, %v1656
  %1679 = vst.msk [vmem:[%s8 + $0x10] sm:$0xff] %vm1075, %v1658
  %1680 = vst.msk [vmem:[%s8 + $0x18] sm:$0xff] %vm1075, %v1660
  %1681 = vst.msk [vmem:[%s8 + $0x20] sm:$0xff] %vm1075, %v1662
  %1682 = vst.msk [vmem:[%s8 + $0x28] sm:$0xff] %vm1075, %v1664
  %1683 = vst.msk [vmem:[%s8 + $0x30] sm:$0xff] %vm1075, %v1666
  %1684 = vst.msk [vmem:[%s8 + $0x38] sm:$0xff] %vm1075, %v1668
  // Predicated region
  $region34: #{roi_block_forward.1} parent=0 // pred_check
    _
  $region35: #{roi_block_forward.1} parent=0 // pred_check_branch
    %1686 = sbr.rel (0) target = $region37
  $region36: #{roi_block_forward.1} parent=0 // pred_region
    _
  $region37: #{roi_block_forward.1} parent=0 // pred_fallthru
    _
  // Predicated region
  $region38: #{roi_block_forward.1} parent=0 // pred_check
    _
  $region39: #{roi_block_forward.1} parent=0 // pred_check_branch
    %1688 = sbr.rel (0) target = $region41
  $region40: #{roi_block_forward.1} parent=0 // pred_region
    _
  $region41: #{roi_block_forward.1} parent=0 // pred_fallthru
    _

</llo_original>
